<compile_context>
chip_gen: v7x
topology: tpu7x:2x2x1
jax: 0.10.0
libtpu: 0.0.40
codegen_flags: <defaults>
</compile_context>

<pallas_src>
import functools

import jax
import jax.numpy as jnp
from jax import lax
from jax.experimental import pallas as pl
from jax.experimental.pallas import tpu as pltpu


# ----------------------------- kernel ---------------------------------------

def _conv2dunit_kernel(p_ref, w_ref, b_ref, g_ref, be_ref, a_ref,
                       sel_ref, selt_ref, tri_ref, o_ref, cs_ref, cp_ref,
                       *, eps, c, f_out, t_chunk):
    """One (batch, time-chunk) step: conv matmul + cumulative LN + PReLU."""
    tc = pl.program_id(1)

    # reset cumulative-stat carries at the start of each batch's time loop
    @pl.when(tc == 0)
    def _():
        cs_ref[...] = jnp.zeros_like(cs_ref)
        cp_ref[...] = jnp.zeros_like(cp_ref)

    # conv as one lane-dense MXU matmul: (C, K) @ (K, Tc*F_out) + bias
    p = p_ref[0, 0]                                             # (K, Tc*F_out)
    y = jnp.dot(w_ref[...], p, preferred_element_type=jnp.float32,
                precision=lax.Precision.HIGHEST)
    y = y + b_ref[...]                                          # (C, Tc*F_out)

    # per-time-step sums over (channel, freq); sel maps lanes -> time steps
    col_sum = jnp.sum(y, axis=0, keepdims=True)                 # (1, Tc*F_out)
    col_pow = jnp.sum(y * y, axis=0, keepdims=True)
    step_sum = jnp.dot(col_sum, sel_ref[...],
                       preferred_element_type=jnp.float32)      # (1, Tc)
    step_pow = jnp.dot(col_pow, sel_ref[...],
                       preferred_element_type=jnp.float32)

    # cumulative stats: within-chunk prefix sums (upper-tri matmul) + carries
    cum_sum = jnp.dot(step_sum, tri_ref[...],
                      preferred_element_type=jnp.float32) + cs_ref[...]
    cum_pow = jnp.dot(step_pow, tri_ref[...],
                      preferred_element_type=jnp.float32) + cp_ref[...]
    cs_ref[...] += jnp.sum(step_sum, axis=1, keepdims=True)
    cp_ref[...] += jnp.sum(step_pow, axis=1, keepdims=True)

    # entry counts for the global time indices covered by this chunk
    idx = lax.broadcasted_iota(jnp.int32, (1, t_chunk), 1)
    cnt = (tc * t_chunk + idx + 1).astype(jnp.float32) * float(c * f_out)

    mean = cum_sum / cnt                                        # (1, Tc)
    var = (cum_pow - 2.0 * mean * cum_sum) / cnt + mean * mean
    inv_std = lax.rsqrt(var + eps)                              # EUP slot

    # broadcast per-time stats back over the Tc*F_out lanes (exact 0/1 matmul)
    mean_f = jnp.dot(mean, selt_ref[...], preferred_element_type=jnp.float32)
    inv_f = jnp.dot(inv_std, selt_ref[...], preferred_element_type=jnp.float32)

    xn = (y - mean_f) * inv_f                                   # (C, Tc*F_out)
    z = xn * g_ref[...] + be_ref[...]                           # per-channel affine
    out = jnp.where(z >= 0.0, z, a_ref[...] * z)                # per-channel PReLU
    o_ref[0, 0] = out.astype(o_ref.dtype)


# ----------------------------- wrapper ---------------------------------------

def conv2dunit_forward(x, conv_w, conv_b, gain, beta, alpha, k, eps=1e-5,
                       t_chunk=None):
    """Forward of Conv2dunit.

    x:      (B, C, T, F) float32
    conv_w: (C, C, k_t, k_f)   (PyTorch OIHW layout)
    conv_b, gain, beta, alpha: (C,)
    """
    k_t, k_f = k
    stride_f = 2
    B, C, T, F = x.shape
    assert conv_w.shape == (C, C, k_t, k_f)

    # causal pad in time (nn.ConstantPad2d((0, 0, k_t - 1, 0))); no-op if k_t == 1
    x_pad = jnp.pad(x, ((0, 0), (0, 0), (k_t - 1, 0), (0, 0)))
    T_out = T
    F_out = (F - k_f) // stride_f + 1
    K = C * k_t * k_f

    if t_chunk is None or T_out % t_chunk != 0:
        t_chunk = T_out
    n_tc = T_out // t_chunk
    tcf = t_chunk * F_out

    # im2col (wrapper-side layout plumbing): (B, n_tc, K, Tc*F_out)
    cols = []
    for dt in range(k_t):
        for df in range(k_f):
            cols.append(x_pad[:, :, dt:dt + T_out,
                              df:df + stride_f * (F_out - 1) + 1:stride_f])
    patches = jnp.stack(cols, axis=2).reshape(B, K, T_out, F_out)
    patches = patches.reshape(B, K, n_tc, t_chunk, F_out)
    patches = jnp.transpose(patches, (0, 2, 1, 3, 4)).reshape(B, n_tc, K, tcf)
    patches = patches.astype(jnp.float32)

    w_mat = conv_w.reshape(C, K).astype(jnp.float32)   # matches (ci, dt, df) flatten
    b_col = conv_b.reshape(C, 1).astype(jnp.float32)
    g_col = gain.reshape(C, 1).astype(jnp.float32)
    be_col = beta.reshape(C, 1).astype(jnp.float32)
    a_col = alpha.reshape(C, 1).astype(jnp.float32)

    # constant helper matrices (DMA'd once, VMEM resident)
    lane_t = jnp.arange(tcf, dtype=jnp.int32) // F_out
    sel = (lane_t[:, None] == jnp.arange(t_chunk, dtype=jnp.int32)[None, :]
           ).astype(jnp.float32)                       # (Tc*F_out, Tc): lane -> t
    sel_t = sel.T                                      # (Tc, Tc*F_out): t -> lanes
    tri = (jnp.arange(t_chunk)[:, None] <= jnp.arange(t_chunk)[None, :]
           ).astype(jnp.float32)                       # (Tc, Tc) prefix-sum matrix

    kernel = functools.partial(_conv2dunit_kernel, eps=float(eps), c=C,
                               f_out=F_out, t_chunk=t_chunk)

    out = pl.pallas_call(
        kernel,
        out_shape=jax.ShapeDtypeStruct((B, n_tc, C, tcf), jnp.float32),
        grid=(B, n_tc),
        in_specs=[
            pl.BlockSpec((1, 1, K, tcf), lambda b, t: (b, t, 0, 0)),   # patches
            pl.BlockSpec((C, K), lambda b, t: (0, 0)),                 # conv weight
            pl.BlockSpec((C, 1), lambda b, t: (0, 0)),                 # conv bias
            pl.BlockSpec((C, 1), lambda b, t: (0, 0)),                 # LN gain
            pl.BlockSpec((C, 1), lambda b, t: (0, 0)),                 # LN bias
            pl.BlockSpec((C, 1), lambda b, t: (0, 0)),                 # PReLU alpha
            pl.BlockSpec((tcf, t_chunk), lambda b, t: (0, 0)),         # lane->t sel
            pl.BlockSpec((t_chunk, tcf), lambda b, t: (0, 0)),         # t->lane sel
            pl.BlockSpec((t_chunk, t_chunk), lambda b, t: (0, 0)),     # prefix tri
        ],
        out_specs=pl.BlockSpec((1, 1, C, tcf), lambda b, t: (b, t, 0, 0)),
        scratch_shapes=[pltpu.VMEM((1, 1), jnp.float32),   # cumulative sum carry
                        pltpu.VMEM((1, 1), jnp.float32)],  # cumulative pow carry
        compiler_params=pltpu.CompilerParams(
            dimension_semantics=("parallel", "arbitrary")),
    )(patches, w_mat, b_col, g_col, be_col, a_col, sel, sel_t, tri)

    # (B, n_tc, C, Tc*F_out) -> (B, C, T, F_out): layout plumbing only
    out = out.reshape(B, n_tc, C, t_chunk, F_out)
    out = jnp.transpose(out, (0, 2, 1, 3, 4)).reshape(B, C, T_out, F_out)
    return out


# ----------------------------- pure-JAX reference ----------------------------

def _reference(x, conv_w, conv_b, gain, beta, alpha, k, eps=1e-5):
    k_t, k_f = k
    x_pad = jnp.pad(x, ((0, 0), (0, 0), (k_t - 1, 0), (0, 0)))
    y = lax.conv_general_dilated(
        x_pad, conv_w, window_strides=(1, 2), padding='VALID',
        dimension_numbers=('NCHW', 'OIHW', 'NCHW'),
        precision=lax.Precision.HIGHEST)
    y = y + conv_b.reshape(1, -1, 1, 1)
    B, C, T, F = y.shape
    step_sum = jnp.sum(y, axis=(1, 3), keepdims=True)
    step_pow = jnp.sum(y * y, axis=(1, 3), keepdims=True)
    cum_sum = jnp.cumsum(step_sum, axis=2)
    cum_pow = jnp.cumsum(step_pow, axis=2)
    cnt = (jnp.arange(1, T + 1, dtype=jnp.float32) * (C * F)).reshape(1, 1, T, 1)
    mean = cum_sum / cnt
    var = (cum_pow - 2.0 * mean * cum_sum) / cnt + mean ** 2
    std = jnp.sqrt(var + eps)
    xn = (y - mean) / std
    z = xn * gain.reshape(1, -1, 1, 1) + beta.reshape(1, -1, 1, 1)
    return jnp.where(z >= 0, z, alpha.reshape(1, -1, 1, 1) * z)


# ----------------------------- demo / check ----------------------------------

if __name__ == "__main__":
    key = jax.random.PRNGKey(0)
    kx, kw, kb, kg, kbe, ka = jax.random.split(key, 6)

    B, C, T, F = 2, 4, 8, 32
    k = (2, 3)                       # (k_t, k_f); module fixes stride = (1, 2)

    x = jax.random.normal(kx, (B, C, T, F), dtype=jnp.float32)
    conv_w = 0.2 * jax.random.normal(kw, (C, C, k[0], k[1]), dtype=jnp.float32)
    conv_b = 0.1 * jax.random.normal(kb, (C,), dtype=jnp.float32)
    gain = 1.0 + 0.1 * jax.random.normal(kg, (C,), dtype=jnp.float32)
    beta = 0.1 * jax.random.normal(kbe, (C,), dtype=jnp.float32)
    alpha = jnp.full((C,), 0.25, dtype=jnp.float32)   # PReLU default init

    # t_chunk=4 -> 2 time chunks per batch: exercises the cumulative-stat carry
    y = conv2dunit_forward(x, conv_w, conv_b, gain, beta, alpha, k, t_chunk=4)
    y = jax.block_until_ready(y)

    y_ref = _reference(x, conv_w, conv_b, gain, beta, alpha, k)
    F_out = (F - k[1]) // 2 + 1
    assert y.shape == (B, C, T, F_out), y.shape
    err = float(jnp.max(jnp.abs(y - y_ref)))
    assert err < 1e-2, f"max abs err {err}"

    print("KERNEL_OK")
</pallas_src>

<mosaic_0001>
module attributes {stable_mosaic.version = 11 : i64} {
  func.func @_conv2dunit_kernel(%arg0: i32, %arg1: i32, %arg2: memref<1x1x24x60xf32, #tpu.memory_space<vmem>>, %arg3: memref<4x24xf32, #tpu.memory_space<vmem>>, %arg4: memref<4x1xf32, #tpu.memory_space<vmem>>, %arg5: memref<4x1xf32, #tpu.memory_space<vmem>>, %arg6: memref<4x1xf32, #tpu.memory_space<vmem>>, %arg7: memref<4x1xf32, #tpu.memory_space<vmem>>, %arg8: memref<60x4xf32, #tpu.memory_space<vmem>>, %arg9: memref<4x60xf32, #tpu.memory_space<vmem>>, %arg10: memref<4x4xf32, #tpu.memory_space<vmem>>, %arg11: memref<1x1x4x60xf32, #tpu.memory_space<vmem>>, %arg12: memref<1x1xf32, #tpu.memory_space<vmem>>, %arg13: memref<1x1xf32, #tpu.memory_space<vmem>>) attributes {dimension_semantics = [#tpu.dimension_semantics<parallel>, #tpu.dimension_semantics<arbitrary>], iteration_bounds = array<i64: 2, 2>, scalar_prefetch = 0 : i64, scratch_operands = 2 : i64, tpu.core_type = #tpu.core_type<tc>, window_params = [{transform_indices = @transform_0, window_bounds = array<i64: 1, 1, 24, 60>}, {pipeline_mode = #tpu.pipeline_mode<synchronous>, transform_indices = @transform_1, window_bounds = array<i64: 4, 24>}, {pipeline_mode = #tpu.pipeline_mode<synchronous>, transform_indices = @transform_2, window_bounds = array<i64: 4, 1>}, {pipeline_mode = #tpu.pipeline_mode<synchronous>, transform_indices = @transform_3, window_bounds = array<i64: 4, 1>}, {pipeline_mode = #tpu.pipeline_mode<synchronous>, transform_indices = @transform_4, window_bounds = array<i64: 4, 1>}, {pipeline_mode = #tpu.pipeline_mode<synchronous>, transform_indices = @transform_5, window_bounds = array<i64: 4, 1>}, {pipeline_mode = #tpu.pipeline_mode<synchronous>, transform_indices = @transform_6, window_bounds = array<i64: 60, 4>}, {pipeline_mode = #tpu.pipeline_mode<synchronous>, transform_indices = @transform_7, window_bounds = array<i64: 4, 60>}, {pipeline_mode = #tpu.pipeline_mode<synchronous>, transform_indices = @transform_8, window_bounds = array<i64: 4, 4>}, {transform_indices = @transform_9, window_bounds = array<i64: 1, 1, 4, 60>}]} {
    %c0_i32 = arith.constant 0 : i32
    %0 = arith.cmpi eq, %arg1, %c0_i32 : i32
    %1 = arith.extui %0 : i1 to i32
    %c0_i32_0 = arith.constant 0 : i32
    %2 = arith.cmpi ne, %1, %c0_i32_0 : i32
    scf.if %2 {
      %cst_56 = arith.constant 0.000000e+00 : f32
      %82 = vector.broadcast %cst_56 : f32 to vector<1x1xf32>
      %c0_57 = arith.constant 0 : index
      %c0_58 = arith.constant 0 : index
      %83 = vector.load %arg12[%c0_57, %c0_58] : memref<1x1xf32, #tpu.memory_space<vmem>>, vector<1x1xf32>
      tpu.vector_store %arg12[%c0_57, %c0_58], %82 {strides = array<i32>} : memref<1x1xf32, #tpu.memory_space<vmem>>, vector<1x1xf32>,
      %cst_59 = arith.constant 0.000000e+00 : f32
      %84 = vector.broadcast %cst_59 : f32 to vector<1x1xf32>
      %c0_60 = arith.constant 0 : index
      %c0_61 = arith.constant 0 : index
      %85 = vector.load %arg13[%c0_60, %c0_61] : memref<1x1xf32, #tpu.memory_space<vmem>>, vector<1x1xf32>
      tpu.vector_store %arg13[%c0_60, %c0_61], %84 {strides = array<i32>} : memref<1x1xf32, #tpu.memory_space<vmem>>, vector<1x1xf32>,
    } else {
    }
    %c0 = arith.constant 0 : index
    %c0_1 = arith.constant 0 : index
    %c0_2 = arith.constant 0 : index
    %c0_3 = arith.constant 0 : index
    %3 = vector.load %arg2[%c0, %c0_1, %c0_2, %c0_3] : memref<1x1x24x60xf32, #tpu.memory_space<vmem>>, vector<1x1x24x60xf32>
    %4 = vector.shape_cast %3 : vector<1x1x24x60xf32> to vector<24x60xf32>
    %c0_4 = arith.constant 0 : index
    %c0_5 = arith.constant 0 : index
    %5 = vector.load %arg3[%c0_4, %c0_5] : memref<4x24xf32, #tpu.memory_space<vmem>>, vector<4x24xf32>
    %cst = arith.constant dense<0.000000e+00> : vector<4x60xf32>
    %6 = tpu.matmul %5, %4, %cst {dimension_numbers = #tpu.dot_dimension_numbers<[1], [0], [0], [1], [0, 0, 1, 1], [], []>, precision = #tpu.contract_precision<fp32>} : vector<4x24xf32>, vector<24x60xf32>, vector<4x60xf32> -> vector<4x60xf32>
    %c0_6 = arith.constant 0 : index
    %c0_7 = arith.constant 0 : index
    %7 = vector.load %arg4[%c0_6, %c0_7] : memref<4x1xf32, #tpu.memory_space<vmem>>, vector<4x1xf32>
    %8 = vector.broadcast %7 : vector<4x1xf32> to vector<4x60xf32>
    %9 = arith.addf %6, %8 : vector<4x60xf32>
    %cst_8 = arith.constant dense<0.000000e+00> : vector<60xf32>
    %10 = vector.multi_reduction <add>, %9, %cst_8 [0] : vector<4x60xf32> to vector<60xf32>
    %11 = vector.shape_cast %10 : vector<60xf32> to vector<1x60xf32>
    %12 = arith.mulf %9, %9 : vector<4x60xf32>
    %cst_9 = arith.constant dense<0.000000e+00> : vector<60xf32>
    %13 = vector.multi_reduction <add>, %12, %cst_9 [0] : vector<4x60xf32> to vector<60xf32>
    %14 = vector.shape_cast %13 : vector<60xf32> to vector<1x60xf32>
    %c0_10 = arith.constant 0 : index
    %c0_11 = arith.constant 0 : index
    %15 = vector.load %arg8[%c0_10, %c0_11] : memref<60x4xf32, #tpu.memory_space<vmem>>, vector<60x4xf32>
    %cst_12 = arith.constant dense<0.000000e+00> : vector<1x4xf32>
    %16 = tpu.matmul %11, %15, %cst_12 {dimension_numbers = #tpu.dot_dimension_numbers<[1], [0], [0], [1], [0, 0, 1, 1], [], []>} : vector<1x60xf32>, vector<60x4xf32>, vector<1x4xf32> -> vector<1x4xf32>
    %c0_13 = arith.constant 0 : index
    %c0_14 = arith.constant 0 : index
    %17 = vector.load %arg8[%c0_13, %c0_14] : memref<60x4xf32, #tpu.memory_space<vmem>>, vector<60x4xf32>
    %cst_15 = arith.constant dense<0.000000e+00> : vector<1x4xf32>
    %18 = tpu.matmul %14, %17, %cst_15 {dimension_numbers = #tpu.dot_dimension_numbers<[1], [0], [0], [1], [0, 0, 1, 1], [], []>} : vector<1x60xf32>, vector<60x4xf32>, vector<1x4xf32> -> vector<1x4xf32>
    %c0_16 = arith.constant 0 : index
    %c0_17 = arith.constant 0 : index
    %19 = vector.load %arg10[%c0_16, %c0_17] : memref<4x4xf32, #tpu.memory_space<vmem>>, vector<4x4xf32>
    %cst_18 = arith.constant dense<0.000000e+00> : vector<1x4xf32>
    %20 = tpu.matmul %16, %19, %cst_18 {dimension_numbers = #tpu.dot_dimension_numbers<[1], [0], [0], [1], [0, 0, 1, 1], [], []>} : vector<1x4xf32>, vector<4x4xf32>, vector<1x4xf32> -> vector<1x4xf32>
    %c0_19 = arith.constant 0 : index
    %c0_20 = arith.constant 0 : index
    %21 = vector.load %arg12[%c0_19, %c0_20] : memref<1x1xf32, #tpu.memory_space<vmem>>, vector<1x1xf32>
    %22 = vector.broadcast %21 : vector<1x1xf32> to vector<1x4xf32>
    %23 = arith.addf %20, %22 : vector<1x4xf32>
    %c0_21 = arith.constant 0 : index
    %c0_22 = arith.constant 0 : index
    %24 = vector.load %arg10[%c0_21, %c0_22] : memref<4x4xf32, #tpu.memory_space<vmem>>, vector<4x4xf32>
    %cst_23 = arith.constant dense<0.000000e+00> : vector<1x4xf32>
    %25 = tpu.matmul %18, %24, %cst_23 {dimension_numbers = #tpu.dot_dimension_numbers<[1], [0], [0], [1], [0, 0, 1, 1], [], []>} : vector<1x4xf32>, vector<4x4xf32>, vector<1x4xf32> -> vector<1x4xf32>
    %c0_24 = arith.constant 0 : index
    %c0_25 = arith.constant 0 : index
    %26 = vector.load %arg13[%c0_24, %c0_25] : memref<1x1xf32, #tpu.memory_space<vmem>>, vector<1x1xf32>
    %27 = vector.broadcast %26 : vector<1x1xf32> to vector<1x4xf32>
    %28 = arith.addf %25, %27 : vector<1x4xf32>
    %c0_26 = arith.constant 0 : index
    %c0_27 = arith.constant 0 : index
    %29 = vector.load %arg12[%c0_26, %c0_27] : memref<1x1xf32, #tpu.memory_space<vmem>>, vector<1x1xf32>
    %cst_28 = arith.constant dense<0.000000e+00> : vector<1xf32>
    %30 = vector.multi_reduction <add>, %16, %cst_28 [1] : vector<1x4xf32> to vector<1xf32>
    %31 = vector.shape_cast %30 : vector<1xf32> to vector<1x1xf32>
    %32 = arith.addf %29, %31 : vector<1x1xf32>
    %c0_29 = arith.constant 0 : index
    %c0_30 = arith.constant 0 : index
    %33 = vector.load %arg12[%c0_29, %c0_30] : memref<1x1xf32, #tpu.memory_space<vmem>>, vector<1x1xf32>
    tpu.vector_store %arg12[%c0_29, %c0_30], %32 {strides = array<i32>} : memref<1x1xf32, #tpu.memory_space<vmem>>, vector<1x1xf32>,
    %c0_31 = arith.constant 0 : index
    %c0_32 = arith.constant 0 : index
    %34 = vector.load %arg13[%c0_31, %c0_32] : memref<1x1xf32, #tpu.memory_space<vmem>>, vector<1x1xf32>
    %cst_33 = arith.constant dense<0.000000e+00> : vector<1xf32>
    %35 = vector.multi_reduction <add>, %18, %cst_33 [1] : vector<1x4xf32> to vector<1xf32>
    %36 = vector.shape_cast %35 : vector<1xf32> to vector<1x1xf32>
    %37 = arith.addf %34, %36 : vector<1x1xf32>
    %c0_34 = arith.constant 0 : index
    %c0_35 = arith.constant 0 : index
    %38 = vector.load %arg13[%c0_34, %c0_35] : memref<1x1xf32, #tpu.memory_space<vmem>>, vector<1x1xf32>
    tpu.vector_store %arg13[%c0_34, %c0_35], %37 {strides = array<i32>} : memref<1x1xf32, #tpu.memory_space<vmem>>, vector<1x1xf32>,
    %39 = tpu.iota {dimensions = array<i32: 1>} : vector<1x4xi32>
    %c4_i32 = arith.constant 4 : i32
    %40 = arith.muli %arg1, %c4_i32 : i32
    %41 = vector.broadcast %40 : i32 to vector<1x4xi32>
    %42 = arith.addi %41, %39 : vector<1x4xi32>
    %c1_i32 = arith.constant 1 : i32
    %43 = vector.broadcast %c1_i32 : i32 to vector<1x4xi32>
    %44 = arith.addi %42, %43 : vector<1x4xi32>
    %45 = arith.sitofp %44 : vector<1x4xi32> to vector<1x4xf32>
    %cst_36 = arith.constant 6.000000e+01 : f32
    %46 = vector.broadcast %cst_36 : f32 to vector<1x4xf32>
    %47 = arith.mulf %45, %46 : vector<1x4xf32>
    %48 = arith.divf %23, %47 : vector<1x4xf32>
    %cst_37 = arith.constant 2.000000e+00 : f32
    %49 = vector.broadcast %cst_37 : f32 to vector<1x4xf32>
    %50 = arith.mulf %49, %48 : vector<1x4xf32>
    %51 = arith.mulf %50, %23 : vector<1x4xf32>
    %52 = arith.subf %28, %51 : vector<1x4xf32>
    %53 = arith.divf %52, %47 : vector<1x4xf32>
    %54 = arith.mulf %48, %48 : vector<1x4xf32>
    %55 = arith.addf %53, %54 : vector<1x4xf32>
    %cst_38 = arith.constant 9.99999974E-6 : f32
    %56 = vector.broadcast %cst_38 : f32 to vector<1x4xf32>
    %57 = arith.addf %55, %56 : vector<1x4xf32>
    %58 = math.rsqrt %57 : vector<1x4xf32>
    %c0_39 = arith.constant 0 : index
    %c0_40 = arith.constant 0 : index
    %59 = vector.load %arg9[%c0_39, %c0_40] : memref<4x60xf32, #tpu.memory_space<vmem>>, vector<4x60xf32>
    %cst_41 = arith.constant dense<0.000000e+00> : vector<1x60xf32>
    %60 = tpu.matmul %48, %59, %cst_41 {dimension_numbers = #tpu.dot_dimension_numbers<[1], [0], [0], [1], [0, 0, 1, 1], [], []>} : vector<1x4xf32>, vector<4x60xf32>, vector<1x60xf32> -> vector<1x60xf32>
    %c0_42 = arith.constant 0 : index
    %c0_43 = arith.constant 0 : index
    %61 = vector.load %arg9[%c0_42, %c0_43] : memref<4x60xf32, #tpu.memory_space<vmem>>, vector<4x60xf32>
    %cst_44 = arith.constant dense<0.000000e+00> : vector<1x60xf32>
    %62 = tpu.matmul %58, %61, %cst_44 {dimension_numbers = #tpu.dot_dimension_numbers<[1], [0], [0], [1], [0, 0, 1, 1], [], []>} : vector<1x4xf32>, vector<4x60xf32>, vector<1x60xf32> -> vector<1x60xf32>
    %63 = vector.broadcast %60 : vector<1x60xf32> to vector<4x60xf32>
    %64 = arith.subf %9, %63 : vector<4x60xf32>
    %65 = vector.broadcast %62 : vector<1x60xf32> to vector<4x60xf32>
    %66 = arith.mulf %64, %65 : vector<4x60xf32>
    %c0_45 = arith.constant 0 : index
    %c0_46 = arith.constant 0 : index
    %67 = vector.load %arg5[%c0_45, %c0_46] : memref<4x1xf32, #tpu.memory_space<vmem>>, vector<4x1xf32>
    %68 = vector.broadcast %67 : vector<4x1xf32> to vector<4x60xf32>
    %69 = arith.mulf %66, %68 : vector<4x60xf32>
    %c0_47 = arith.constant 0 : index
    %c0_48 = arith.constant 0 : index
    %70 = vector.load %arg6[%c0_47, %c0_48] : memref<4x1xf32, #tpu.memory_space<vmem>>, vector<4x1xf32>
    %71 = vector.broadcast %70 : vector<4x1xf32> to vector<4x60xf32>
    %72 = arith.addf %69, %71 : vector<4x60xf32>
    %cst_49 = arith.constant 0.000000e+00 : f32
    %73 = vector.broadcast %cst_49 : f32 to vector<4x60xf32>
    %74 = arith.cmpf oge, %72, %73 : vector<4x60xf32>
    %c0_50 = arith.constant 0 : index
    %c0_51 = arith.constant 0 : index
    %75 = vector.load %arg7[%c0_50, %c0_51] : memref<4x1xf32, #tpu.memory_space<vmem>>, vector<4x1xf32>
    %76 = vector.broadcast %75 : vector<4x1xf32> to vector<4x60xf32>
    %77 = arith.mulf %76, %72 : vector<4x60xf32>
    %78 = arith.select %74, %72, %77 : vector<4x60xi1>, vector<4x60xf32>
    %c0_52 = arith.constant 0 : index
    %c0_53 = arith.constant 0 : index
    %c0_54 = arith.constant 0 : index
    %c0_55 = arith.constant 0 : index
    %79 = vector.load %arg11[%c0_52, %c0_53, %c0_54, %c0_55] : memref<1x1x4x60xf32, #tpu.memory_space<vmem>>, vector<1x1x4x60xf32>
    %80 = vector.shape_cast %79 : vector<1x1x4x60xf32> to vector<4x60xf32>
    %81 = vector.shape_cast %78 : vector<4x60xf32> to vector<1x1x4x60xf32>
    tpu.vector_store %arg11[%c0_52, %c0_53, %c0_54, %c0_55], %81 {strides = array<i32>} : memref<1x1x4x60xf32, #tpu.memory_space<vmem>>, vector<1x1x4x60xf32>,
    return
  }
  func.func @transform_0(%arg0: i32, %arg1: i32) -> (i32, i32, i32, i32) {
    %c0_i32 = arith.constant 0 : i32
    %c0_i32_0 = arith.constant 0 : i32
    %c0_i32_1 = arith.constant 0 : i32
    return %arg0, %arg1, %c0_i32, %c0_i32_0 : i32, i32, i32, i32
  }
  func.func @transform_1(%arg0: i32, %arg1: i32) -> (i32, i32) {
    %c0_i32 = arith.constant 0 : i32
    %c0_i32_0 = arith.constant 0 : i32
    %c0_i32_1 = arith.constant 0 : i32
    return %c0_i32, %c0_i32_0 : i32, i32
  }
  func.func @transform_2(%arg0: i32, %arg1: i32) -> (i32, i32) {
    %c0_i32 = arith.constant 0 : i32
    %c0_i32_0 = arith.constant 0 : i32
    %c0_i32_1 = arith.constant 0 : i32
    return %c0_i32, %c0_i32_0 : i32, i32
  }
  func.func @transform_3(%arg0: i32, %arg1: i32) -> (i32, i32) {
    %c0_i32 = arith.constant 0 : i32
    %c0_i32_0 = arith.constant 0 : i32
    %c0_i32_1 = arith.constant 0 : i32
    return %c0_i32, %c0_i32_0 : i32, i32
  }
  func.func @transform_4(%arg0: i32, %arg1: i32) -> (i32, i32) {
    %c0_i32 = arith.constant 0 : i32
    %c0_i32_0 = arith.constant 0 : i32
    %c0_i32_1 = arith.constant 0 : i32
    return %c0_i32, %c0_i32_0 : i32, i32
  }
  func.func @transform_5(%arg0: i32, %arg1: i32) -> (i32, i32) {
    %c0_i32 = arith.constant 0 : i32
    %c0_i32_0 = arith.constant 0 : i32
    %c0_i32_1 = arith.constant 0 : i32
    return %c0_i32, %c0_i32_0 : i32, i32
  }
  func.func @transform_6(%arg0: i32, %arg1: i32) -> (i32, i32) {
    %c0_i32 = arith.constant 0 : i32
    %c0_i32_0 = arith.constant 0 : i32
    %c0_i32_1 = arith.constant 0 : i32
    return %c0_i32, %c0_i32_0 : i32, i32
  }
  func.func @transform_7(%arg0: i32, %arg1: i32) -> (i32, i32) {
    %c0_i32 = arith.constant 0 : i32
    %c0_i32_0 = arith.constant 0 : i32
    %c0_i32_1 = arith.constant 0 : i32
    return %c0_i32, %c0_i32_0 : i32, i32
  }
  func.func @transform_8(%arg0: i32, %arg1: i32) -> (i32, i32) {
    %c0_i32 = arith.constant 0 : i32
    %c0_i32_0 = arith.constant 0 : i32
    %c0_i32_1 = arith.constant 0 : i32
    return %c0_i32, %c0_i32_0 : i32, i32
  }
  func.func @transform_9(%arg0: i32, %arg1: i32) -> (i32, i32, i32, i32) {
    %c0_i32 = arith.constant 0 : i32
    %c0_i32_0 = arith.constant 0 : i32
    %c0_i32_1 = arith.constant 0 : i32
    return %arg0, %arg1, %c0_i32, %c0_i32_0 : i32, i32, i32, i32
  }
}

</mosaic_0001>

<llo_original>
// kernel: tpu_custom_call.1
$region0: #{tpu_custom_call.1}
  #allocation0 [shape = 'u32[]', space=smem, size = 0x4, offset = 0x4, fixed_abs, tag = 'smem constant byte address 0x4 - core index']
  #allocation1 [shape = 'u32[144,128]{1,0:T(1,128)}', space=vmem, size = 0x12000, scoped, tag = 'internal scratch']
  #allocation2 [shape = 'f32[1,1]{1,0:T(1,128)}', space=vmem, size = 0x200, scoped, tag = 'scratch operand']
  #allocation3 [shape = 'f32[1,1]{1,0:T(1,128)}', space=vmem, size = 0x200, scoped, tag = 'scratch operand']
  %s0 = inlined_call_operand.hbm [shape: f32[2,2,24,60], index: 0, kind: input, shape index: {}]
  %s1 = inlined_call_operand.vmem [shape: f32[4,24], index: 1, kind: input, shape index: {}]
  %s2 = inlined_call_operand.vmem [shape: f32[4,1], index: 2, kind: input, shape index: {}]
  %s3 = inlined_call_operand.vmem [shape: f32[4,1], index: 3, kind: input, shape index: {}]
  %s4 = inlined_call_operand.vmem [shape: f32[4,1], index: 4, kind: input, shape index: {}]
  %s5 = inlined_call_operand.vmem [shape: f32[4,1], index: 5, kind: input, shape index: {}]
  %s6 = inlined_call_operand.vmem [shape: f32[60,4], index: 6, kind: input, shape index: {}]
  %s7 = inlined_call_operand.vmem [shape: f32[4,60], index: 7, kind: input, shape index: {}]
  %s8 = inlined_call_operand.vmem [shape: f32[4,4], index: 8, kind: input, shape index: {}]
  %s9 = inlined_call_operand.hbm [shape: f32[2,2,4,60], index: 9, kind: output, shape index: {}]
  %s10 = sld [smem:[#allocation0]]
  $region77: #{tpu_custom_call.1} parent=0
    _
  %s12 = ssub.s32 1, %s10
  %s13 = scalar_select 0, %s12, %s10
  $region1: #{tpu_custom_call.1} parent=0
    #allocation4 [shape = 'u8[24576]{0}', space=vmem, size = 0x6000, scoped, tag = 'input window, operand 0']
    #allocation5 [shape = 's32[2]{0}', space=sflag, size = 0x8, scoped, tag = 'scoped memory for tpu_custom_call.1']
    #allocation6 [shape = 's32[2]{0}', space=sflag, size = 0x8, scoped, tag = 'scoped memory for tpu_custom_call.1']
    #allocation7 [shape = 'u8[4096]{0}', space=vmem, size = 0x1000, scoped, tag = 'output window, operand 0']
    %14 = vsyncpa [#allocation5], 0
    %s15 = scalar_lea.sflag [#allocation5], 1
    %16 = vsyncpa %s15, 0
    %17 = vsyncpa [#allocation6], 0
    %s18 = scalar_lea.sflag [#allocation6], 1
    %19 = vsyncpa %s18, 0
    loop: start=0, step=1, limit=6
    $region2: #{tpu_custom_call.1} parent=1 // loop_pre_header
      _
    $region3: #{tpu_custom_call.1} parent=1 // loop_header
      %s21 = sphi 0, %s25
      %p22 = scmp.ge.s32.totalorder %s21, 6
      %s28 = sphi 0, %s40
      %s29 = sphi 0, %s36
      %s30 = sphi 0, %s28
      %s31 = sphi 0, %s29
      %s32 = sphi 0, %s30
      %s33 = sphi 0, %s31
      %s45 = sphi 0, %s47
      %s48 = sphi 0, %s45
      %s49 = sphi 0, %s48
      %s65 = sphi 0, %s49
      %s69 = sphi 0, %s69
      %s71 = sphi 0, %s69
      %s72 = sphi 0, %s71
      %s86 = sphi 0, %s72
      %s90 = sphi 0, %s90
      %s92 = sphi 0, %s90
      %s93 = sphi 0, %s92
      %s107 = sphi 0, %s93
      %s111 = sphi 0, %s111
      %s113 = sphi 0, %s111
      %s114 = sphi 0, %s113
      %s128 = sphi 0, %s114
      %s132 = sphi 0, %s132
      %s134 = sphi 0, %s132
      %s135 = sphi 0, %s134
      %s149 = sphi 0, %s135
      %s153 = sphi 0, %s153
      %s155 = sphi 0, %s153
      %s156 = sphi 0, %s155
      %s170 = sphi 0, %s156
      %s174 = sphi 0, %s174
      %s176 = sphi 0, %s174
      %s177 = sphi 0, %s176
      %s191 = sphi 0, %s177
      %s195 = sphi 0, %s195
      %s197 = sphi 0, %s195
      %s198 = sphi 0, %s197
      %s212 = sphi 0, %s198
      %s216 = sphi 0, %s216
      %s218 = sphi 0, %s216
      %s219 = sphi 0, %s218
      %s233 = sphi 0, %s219
      %s241 = sphi 0, %s243
      %s244 = sphi 0, %s241
      %s245 = sphi 0, %s244
      %s261 = sphi 0, %s245
    $region4: #{tpu_custom_call.1} parent=1 // loop_header_branch
      %24 = sbr.rel (%p22) target = $region8
    $region5: #{tpu_custom_call.1} parent=1 // loop_body
      %s26 = ssub.s32 %s21, 1
      %s27 = ssub.s32 %s21, 2
      %s34 = sadd.s32 1, %s29
      %p35 = scmp.ge.s32.totalorder %s34, 2
      %s36 = scalar_select %p35, 0, %s34
      %s37 = sadd.s32 1, %s28
      %s38 = scalar_select %p35, %s37, %s28
      %p39 = scmp.ge.s32.totalorder %s38, 2
      %s40 = scalar_select %p39, 0, %s38
      %s41 = ssub.s32 %s28, %s40
      %s42 = ssub.s32 %s29, %s36
      %s43 = sor.u32 %s41, %s42
      %p44 = scmp.eq.s32.totalorder %s43, 0
      %s46 = sadd.s32 %s45, 1
      %s47 = scalar_select %p44, %s45, %s46
      %p50 = pneg %p44
      %p51 = scmp.eq.s32.totalorder %s21, 3
      %p52 = por %p50, %p51
      %p53 = scmp.ne.s32.totalorder %s45, %s48
      %p54 = scmp.eq.s32.totalorder %s21, 0
      %p55 = por %p53, %p54
      %p56 = scmp.ne.s32.totalorder %s45, %s48
      %p57 = scmp.eq.s32.totalorder %s26, 3
      %p58 = por %p56, %p57
      %p59 = scmp.ne.s32.totalorder %s48, %s49
      %p60 = scmp.eq.s32.totalorder %s26, 0
      %p61 = por %p59, %p60
      %p62 = scmp.ne.s32.totalorder %s48, %s49
      %p63 = scmp.eq.s32.totalorder %s27, 3
      %p64 = por %p62, %p63
      %p66 = scmp.ne.s32.totalorder %s49, %s65
      %p67 = scmp.eq.s32.totalorder %s27, 0
      %p68 = por %p66, %p67
      %s70 = sadd.s32 %s69, 1
      %p73 = scmp.eq.s32.totalorder %s21, 3
      %p74 = scmp.ne.s32.totalorder %s69, %s71
      %p75 = scmp.eq.s32.totalorder %s21, 0
      %p76 = por %p74, %p75
      %p77 = scmp.ne.s32.totalorder %s69, %s71
      %p78 = scmp.eq.s32.totalorder %s26, 3
      %p79 = por %p77, %p78
      %p80 = scmp.ne.s32.totalorder %s71, %s72
      %p81 = scmp.eq.s32.totalorder %s26, 0
      %p82 = por %p80, %p81
      %p83 = scmp.ne.s32.totalorder %s71, %s72
      %p84 = scmp.eq.s32.totalorder %s27, 3
      %p85 = por %p83, %p84
      %p87 = scmp.ne.s32.totalorder %s72, %s86
      %p88 = scmp.eq.s32.totalorder %s27, 0
      %p89 = por %p87, %p88
      %s91 = sadd.s32 %s90, 1
      %p94 = scmp.eq.s32.totalorder %s21, 3
      %p95 = scmp.ne.s32.totalorder %s90, %s92
      %p96 = scmp.eq.s32.totalorder %s21, 0
      %p97 = por %p95, %p96
      %p98 = scmp.ne.s32.totalorder %s90, %s92
      %p99 = scmp.eq.s32.totalorder %s26, 3
      %p100 = por %p98, %p99
      %p101 = scmp.ne.s32.totalorder %s92, %s93
      %p102 = scmp.eq.s32.totalorder %s26, 0
      %p103 = por %p101, %p102
      %p104 = scmp.ne.s32.totalorder %s92, %s93
      %p105 = scmp.eq.s32.totalorder %s27, 3
      %p106 = por %p104, %p105
      %p108 = scmp.ne.s32.totalorder %s93, %s107
      %p109 = scmp.eq.s32.totalorder %s27, 0
      %p110 = por %p108, %p109
      %s112 = sadd.s32 %s111, 1
      %p115 = scmp.eq.s32.totalorder %s21, 3
      %p116 = scmp.ne.s32.totalorder %s111, %s113
      %p117 = scmp.eq.s32.totalorder %s21, 0
      %p118 = por %p116, %p117
      %p119 = scmp.ne.s32.totalorder %s111, %s113
      %p120 = scmp.eq.s32.totalorder %s26, 3
      %p121 = por %p119, %p120
      %p122 = scmp.ne.s32.totalorder %s113, %s114
      %p123 = scmp.eq.s32.totalorder %s26, 0
      %p124 = por %p122, %p123
      %p125 = scmp.ne.s32.totalorder %s113, %s114
      %p126 = scmp.eq.s32.totalorder %s27, 3
      %p127 = por %p125, %p126
      %p129 = scmp.ne.s32.totalorder %s114, %s128
      %p130 = scmp.eq.s32.totalorder %s27, 0
      %p131 = por %p129, %p130
      %s133 = sadd.s32 %s132, 1
      %p136 = scmp.eq.s32.totalorder %s21, 3
      %p137 = scmp.ne.s32.totalorder %s132, %s134
      %p138 = scmp.eq.s32.totalorder %s21, 0
      %p139 = por %p137, %p138
      %p140 = scmp.ne.s32.totalorder %s132, %s134
      %p141 = scmp.eq.s32.totalorder %s26, 3
      %p142 = por %p140, %p141
      %p143 = scmp.ne.s32.totalorder %s134, %s135
      %p144 = scmp.eq.s32.totalorder %s26, 0
      %p145 = por %p143, %p144
      %p146 = scmp.ne.s32.totalorder %s134, %s135
      %p147 = scmp.eq.s32.totalorder %s27, 3
      %p148 = por %p146, %p147
      %p150 = scmp.ne.s32.totalorder %s135, %s149
      %p151 = scmp.eq.s32.totalorder %s27, 0
      %p152 = por %p150, %p151
      %s154 = sadd.s32 %s153, 1
      %p157 = scmp.eq.s32.totalorder %s21, 3
      %p158 = scmp.ne.s32.totalorder %s153, %s155
      %p159 = scmp.eq.s32.totalorder %s21, 0
      %p160 = por %p158, %p159
      %p161 = scmp.ne.s32.totalorder %s153, %s155
      %p162 = scmp.eq.s32.totalorder %s26, 3
      %p163 = por %p161, %p162
      %p164 = scmp.ne.s32.totalorder %s155, %s156
      %p165 = scmp.eq.s32.totalorder %s26, 0
      %p166 = por %p164, %p165
      %p167 = scmp.ne.s32.totalorder %s155, %s156
      %p168 = scmp.eq.s32.totalorder %s27, 3
      %p169 = por %p167, %p168
      %p171 = scmp.ne.s32.totalorder %s156, %s170
      %p172 = scmp.eq.s32.totalorder %s27, 0
      %p173 = por %p171, %p172
      %s175 = sadd.s32 %s174, 1
      %p178 = scmp.eq.s32.totalorder %s21, 3
      %p179 = scmp.ne.s32.totalorder %s174, %s176
      %p180 = scmp.eq.s32.totalorder %s21, 0
      %p181 = por %p179, %p180
      %p182 = scmp.ne.s32.totalorder %s174, %s176
      %p183 = scmp.eq.s32.totalorder %s26, 3
      %p184 = por %p182, %p183
      %p185 = scmp.ne.s32.totalorder %s176, %s177
      %p186 = scmp.eq.s32.totalorder %s26, 0
      %p187 = por %p185, %p186
      %p188 = scmp.ne.s32.totalorder %s176, %s177
      %p189 = scmp.eq.s32.totalorder %s27, 3
      %p190 = por %p188, %p189
      %p192 = scmp.ne.s32.totalorder %s177, %s191
      %p193 = scmp.eq.s32.totalorder %s27, 0
      %p194 = por %p192, %p193
      %s196 = sadd.s32 %s195, 1
      %p199 = scmp.eq.s32.totalorder %s21, 3
      %p200 = scmp.ne.s32.totalorder %s195, %s197
      %p201 = scmp.eq.s32.totalorder %s21, 0
      %p202 = por %p200, %p201
      %p203 = scmp.ne.s32.totalorder %s195, %s197
      %p204 = scmp.eq.s32.totalorder %s26, 3
      %p205 = por %p203, %p204
      %p206 = scmp.ne.s32.totalorder %s197, %s198
      %p207 = scmp.eq.s32.totalorder %s26, 0
      %p208 = por %p206, %p207
      %p209 = scmp.ne.s32.totalorder %s197, %s198
      %p210 = scmp.eq.s32.totalorder %s27, 3
      %p211 = por %p209, %p210
      %p213 = scmp.ne.s32.totalorder %s198, %s212
      %p214 = scmp.eq.s32.totalorder %s27, 0
      %p215 = por %p213, %p214
      %s217 = sadd.s32 %s216, 1
      %p220 = scmp.eq.s32.totalorder %s21, 3
      %p221 = scmp.ne.s32.totalorder %s216, %s218
      %p222 = scmp.eq.s32.totalorder %s21, 0
      %p223 = por %p221, %p222
      %p224 = scmp.ne.s32.totalorder %s216, %s218
      %p225 = scmp.eq.s32.totalorder %s26, 3
      %p226 = por %p224, %p225
      %p227 = scmp.ne.s32.totalorder %s218, %s219
      %p228 = scmp.eq.s32.totalorder %s26, 0
      %p229 = por %p227, %p228
      %p230 = scmp.ne.s32.totalorder %s218, %s219
      %p231 = scmp.eq.s32.totalorder %s27, 3
      %p232 = por %p230, %p231
      %p234 = scmp.ne.s32.totalorder %s219, %s233
      %p235 = scmp.eq.s32.totalorder %s27, 0
      %p236 = por %p234, %p235
      %s237 = ssub.s32 %s28, %s40
      %s238 = ssub.s32 %s29, %s36
      %s239 = sor.u32 %s237, %s238
      %p240 = scmp.eq.s32.totalorder %s239, 0
      %s242 = sadd.s32 %s241, 1
      %s243 = scalar_select %p240, %s241, %s242
      %p246 = pneg %p240
      %p247 = scmp.eq.s32.totalorder %s21, 3
      %p248 = por %p246, %p247
      %p249 = scmp.ne.s32.totalorder %s241, %s244
      %p250 = scmp.eq.s32.totalorder %s21, 0
      %p251 = por %p249, %p250
      %p252 = scmp.ne.s32.totalorder %s241, %s244
      %p253 = scmp.eq.s32.totalorder %s26, 3
      %p254 = por %p252, %p253
      %p255 = scmp.ne.s32.totalorder %s244, %s245
      %p256 = scmp.eq.s32.totalorder %s26, 0
      %p257 = por %p255, %p256
      %p258 = scmp.ne.s32.totalorder %s244, %s245
      %p259 = scmp.eq.s32.totalorder %s27, 3
      %p260 = por %p258, %p259
      %p262 = scmp.ne.s32.totalorder %s245, %s261
      %p263 = scmp.eq.s32.totalorder %s27, 0
      %p264 = por %p262, %p263
      %p265 = scmp.le.s32.totalorder 1, %s21
      %p266 = scmp.lt.s32.totalorder %s21, 5
      %p267 = pnand %p265, %p266
      %p268 = pneg %p267
      // Predicated region
      $region9: #{tpu_custom_call.1} parent=5 // pred_check
        _
      $region10: #{tpu_custom_call.1} parent=5 // pred_check_branch
        %270 = sbr.rel (%p267) target = $region12
      $region11: #{tpu_custom_call.1} parent=5 // pred_region
        %s271 = ssub.s32 %s21, 1
        // Predicated region
        $region13: #{tpu_custom_call.1} parent=11 // pred_check
          %p272 = pneg %p82
        $region14: #{tpu_custom_call.1} parent=11 // pred_check_branch
          %274 = sbr.rel (%p272) target = $region16
        $region15: #{tpu_custom_call.1} parent=11 // pred_region
          _
        $region16: #{tpu_custom_call.1} parent=11 // pred_fallthru
          _
        // Predicated region
        $region17: #{tpu_custom_call.1} parent=11 // pred_check
          %p275 = pneg %p103
        $region18: #{tpu_custom_call.1} parent=11 // pred_check_branch
          %277 = sbr.rel (%p275) target = $region20
        $region19: #{tpu_custom_call.1} parent=11 // pred_region
          _
        $region20: #{tpu_custom_call.1} parent=11 // pred_fallthru
          _
        // Predicated region
        $region21: #{tpu_custom_call.1} parent=11 // pred_check
          %p278 = pneg %p124
        $region22: #{tpu_custom_call.1} parent=11 // pred_check_branch
          %280 = sbr.rel (%p278) target = $region24
        $region23: #{tpu_custom_call.1} parent=11 // pred_region
          _
        $region24: #{tpu_custom_call.1} parent=11 // pred_fallthru
          _
        // Predicated region
        $region25: #{tpu_custom_call.1} parent=11 // pred_check
          %p281 = pneg %p145
        $region26: #{tpu_custom_call.1} parent=11 // pred_check_branch
          %283 = sbr.rel (%p281) target = $region28
        $region27: #{tpu_custom_call.1} parent=11 // pred_region
          _
        $region28: #{tpu_custom_call.1} parent=11 // pred_fallthru
          _
        // Predicated region
        $region29: #{tpu_custom_call.1} parent=11 // pred_check
          %p284 = pneg %p166
        $region30: #{tpu_custom_call.1} parent=11 // pred_check_branch
          %286 = sbr.rel (%p284) target = $region32
        $region31: #{tpu_custom_call.1} parent=11 // pred_region
          _
        $region32: #{tpu_custom_call.1} parent=11 // pred_fallthru
          _
        // Predicated region
        $region33: #{tpu_custom_call.1} parent=11 // pred_check
          %p287 = pneg %p187
        $region34: #{tpu_custom_call.1} parent=11 // pred_check_branch
          %289 = sbr.rel (%p287) target = $region36
        $region35: #{tpu_custom_call.1} parent=11 // pred_region
          _
        $region36: #{tpu_custom_call.1} parent=11 // pred_fallthru
          _
        // Predicated region
        $region37: #{tpu_custom_call.1} parent=11 // pred_check
          %p290 = pneg %p208
        $region38: #{tpu_custom_call.1} parent=11 // pred_check_branch
          %292 = sbr.rel (%p290) target = $region40
        $region39: #{tpu_custom_call.1} parent=11 // pred_region
          _
        $region40: #{tpu_custom_call.1} parent=11 // pred_fallthru
          _
        // Predicated region
        $region41: #{tpu_custom_call.1} parent=11 // pred_check
          %p293 = pneg %p229
        $region42: #{tpu_custom_call.1} parent=11 // pred_check_branch
          %295 = sbr.rel (%p293) target = $region44
        $region43: #{tpu_custom_call.1} parent=11 // pred_region
          _
        $region44: #{tpu_custom_call.1} parent=11 // pred_fallthru
          _
      $region12: #{tpu_custom_call.1} parent=5 // pred_fallthru
        _
      %p296 = scmp.lt.s32.totalorder %s21, 4
      // Predicated region
      $region45: #{tpu_custom_call.1} parent=5 // pred_check
        %p297 = pneg %p296
      $region46: #{tpu_custom_call.1} parent=5 // pred_check_branch
        %299 = sbr.rel (%p297) target = $region48
      $region47: #{tpu_custom_call.1} parent=5 // pred_region
        // Predicated region
        $region49: #{tpu_custom_call.1} parent=47 // pred_check
          %p300 = pneg %p55
        $region50: #{tpu_custom_call.1} parent=47 // pred_check_branch
          %302 = sbr.rel (%p300) target = $region52
        $region51: #{tpu_custom_call.1} parent=47 // pred_region
          %s303 = sand.u32 %s45, 1
          %s304 = scalar_lea.sflag [#allocation5], %s303
          %s305 = sand.u32 %s45, 1
          %s306 = smul.addr %s305, 24
          %s307 = scalar_lea.vmem [#allocation4], %s306
          %s309 = ssub.s32 384, 384
          %310 = vsyncadd %s304, %s309
          %s311 = smul.addr %s29, 3
          %s312 = smul.addr %s28, 6
          %s313 = sadd.s32 %s311, %s312
          %s314 = smul.addr %s313, 128
          %s315 = scalar_lea.hbm %s0, %s314
          %s316 = sshll.u32 %s307, 4
          %s317 = int_to_ptr.vmem [resolvable:$true] %s316
          %322 = dma.hbm_to_vmem [thread:$0]  %s315, 384, %s317, %s304, 128, 128, 8
        $region52: #{tpu_custom_call.1} parent=47 // pred_fallthru
          _
      $region48: #{tpu_custom_call.1} parent=5 // pred_fallthru
        _
      %p323 = scmp.le.s32.totalorder 1, %s21
      %p324 = scmp.lt.s32.totalorder %s21, 5
      %p325 = pnand %p323, %p324
      %p326 = pneg %p325
      // Predicated region
      $region53: #{tpu_custom_call.1} parent=5 // pred_check
        _
      $region54: #{tpu_custom_call.1} parent=5 // pred_check_branch
        %328 = sbr.rel (%p325) target = $region56
      $region55: #{tpu_custom_call.1} parent=5 // pred_region
        %s329 = ssub.s32 %s21, 1
        %s330 = sand.u32 %s48, 1
        %s331 = scalar_lea.sflag [#allocation5], %s330
        %s332 = sand.u32 %s48, 1
        %s333 = smul.addr %s332, 24
        %s334 = scalar_lea.vmem [#allocation4], %s333
        // Predicated region
        $region57: #{tpu_custom_call.1} parent=55 // pred_check
          %p335 = pneg %p61
        $region58: #{tpu_custom_call.1} parent=55 // pred_check_branch
          %337 = sbr.rel (%p335) target = $region60
        $region59: #{tpu_custom_call.1} parent=55 // pred_region
          %338 = dma.done %s331, 384
        $region60: #{tpu_custom_call.1} parent=55 // pred_fallthru
          _
        %s339 = sand.u32 %s48, 1
        %s340 = scalar_lea.sflag [#allocation5], %s339
        %s341 = sand.u32 %s48, 1
        %s342 = smul.addr %s341, 24
        %s343 = scalar_lea.vmem [#allocation4], %s342
        %p344 = pneg %p61
        %p345 = pneg %p58
        %p346 = pneg %p82
        %p347 = pneg %p79
        %p348 = pneg %p103
        %p349 = pneg %p100
        %p350 = pneg %p124
        %p351 = pneg %p121
        %p352 = pneg %p145
        %p353 = pneg %p142
        %p354 = pneg %p166
        %p355 = pneg %p163
        %p356 = pneg %p187
        %p357 = pneg %p184
        %p358 = pneg %p208
        %p359 = pneg %p205
        %p360 = pneg %p229
        %p361 = pneg %p226
        %p362 = pneg %p257
        %p363 = pneg %p254
        %s364 = sand.u32 %s244, 1
        %s365 = scalar_lea.sflag [#allocation6], %s364
        %s366 = sand.u32 %s244, 1
        %s367 = smul.addr %s366, 4
        %s368 = scalar_lea.vmem [#allocation7], %s367
        %p369 = scmp.eq.s32.totalorder %s31, 0
        // Predicated region
        $region61: #{tpu_custom_call.1} parent=55 // pred_check
          %p370 = pneg %p369
        $region62: #{tpu_custom_call.1} parent=55 // pred_check_branch
          %372 = sbr.rel (%p370) target = $region64
        $region63: #{tpu_custom_call.1} parent=55 // pred_region
          %vm373 = vcmask 0
          %374 = vst.msk [vmem:[#allocation2] sm:$0x1] %vm373, 0.0
          %375 = vst.msk [vmem:[#allocation3] sm:$0x1] %vm373, 0.0
        $region64: #{tpu_custom_call.1} parent=55 // pred_fallthru
          _
        %v376 = vld [vmem:[%s334] sm:$0xff]
        %v377 = vld [vmem:[%s334 + $0x8] sm:$0xff]
        %v378 = vld [vmem:[%s334 + $0x10] sm:$0xff]
        %v379 = vld [vmem:[%s1] sm:$0xf]
        %v380 = vld [vmem:[%s2] sm:$0xf]
        %382 = vset.pattern.permute.xlu0 0
        %383 = vperm.xlu0 %382, %v380
        %v384 = vpop.permute.xlu0 %383
        %vm386 = vcmask 195584
        %v388 = vsel %vm386, %v379, 0
        %390 = vmatprep.subr.mxu0 0.0
        %v391 = vand.u32 %v376, 4294901760
        %392 = vmatpush1.msra.mxu0 %v391
        %393 = vmatprep.subr.mxu0 0.0
        %v394 = vand.u32 %v377, 4294901760
        %395 = vmatpush1.msra.mxu0 %v394
        %396 = vmatprep.subr.mxu0 0.0
        %v397 = vand.u32 %v378, 4294901760
        %398 = vmatpush1.msra.mxu0 %v397
        %399 = vmatprep.subr.mxu0 0.0
        %400 = vmatpush1.msra.mxu0 0.0
        %401 = vmatprep.subr.mxu0 0.0
        %402 = vmatpush1.msra.mxu0 0.0
        %403 = vmatprep.subr.mxu0 0.0
        %404 = vmatpush1.msra.mxu0 0.0
        %405 = vmatprep.subr.mxu0 0.0
        %406 = vmatpush1.msra.mxu0 0.0
        %407 = vmatprep.subr.mxu0 0.0
        %408 = vmatpush1.msra.mxu0 0.0
        %409 = vmatprep.subr.mxu0 0.0
        %410 = vmatpush1.msra.mxu0 0.0
        %411 = vmatprep.subr.mxu0 0.0
        %412 = vmatpush1.msra.mxu0 0.0
        %413 = vmatprep.subr.mxu0 0.0
        %414 = vmatpush1.msra.mxu0 0.0
        %415 = vmatprep.subr.mxu0 0.0
        %416 = vmatpush1.msra.mxu0 0.0
        %417 = vmatprep.subr.mxu0 0.0
        %418 = vmatpush1.msra.mxu0 0.0
        %419 = vmatprep.subr.mxu0 0.0
        %420 = vmatpush1.msra.mxu0 0.0
        %421 = vmatprep.subr.mxu0 0.0
        %422 = vmatpush1.msra.mxu0 0.0
        %423 = vmatprep.subr.mxu0 0.0
        %424 = vmatpush1.msra.mxu0 0.0
        %425 = vmatprep.subr.mxu0 0.0
        %426 = vmatpush1.msra.mxu0 0.0
        %427 = vmatprep.subr.mxu0 0.0
        %428 = vmatpush1.msra.mxu0 0.0
        %429 = vmatprep.subr.mxu0 0.0
        %430 = vmatpush1.msra.mxu0 0.0
        %431 = vmatprep.subr.mxu0 0.0
        %432 = vmatpush1.msra.mxu0 0.0
        %433 = vmatprep.subr.mxu0 0.0
        %434 = vmatpush1.msra.mxu0 0.0
        %435 = vmatprep.subr.mxu0 0.0
        %436 = vmatpush1.msra.mxu0 0.0
        %437 = vmatprep.subr.mxu0 0.0
        %438 = vmatpush1.msra.mxu0 0.0
        %439 = vmatprep.subr.mxu0 0.0
        %440 = vmatpush1.msra.mxu0 0.0
        %441 = vmatprep.subr.mxu0 0.0
        %442 = vmatpush1.msra.mxu0 0.0
        %443 = vmatprep.subr.mxu0 0.0
        %444 = vmatpush1.msra.mxu0 0.0
        %445 = vmatprep.subr.mxu0 0.0
        %446 = vmatpush1.msra.mxu0 0.0
        %447 = vmatprep.subr.mxu0 0.0
        %448 = vmatpush1.msra.mxu0 0.0
        %449 = vmatprep.subr.mxu0 0.0
        %450 = vmatpush1.msra.mxu0 0.0
        %451 = vmatprep.subr.mxu0 0.0
        %452 = vmatpush1.msra.mxu0 0.0
        %453 = vmatprep.subr.mxu0 0.0
        %454 = vmatpush1.msra.mxu0 0.0
        %455 = vmatprep.subr.mxu0 0.0
        %456 = vmatpush1.msra.mxu0 0.0
        %457 = vmatprep.mubr.f32.mxu0 0.0
        %v458 = vand.u32 %v388, 4294901760
        %v459 = vsub.f32 %v388, %v458
        %v460 = vand.u32 %v459, 4294901760
        %v461 = vsub.f32 %v459, %v460
        %v462 = vand.u32 %v461, 4294901760
        %463 = vmatmul.mubr.f32.gmra.mrb[0].mxu0 %v462
        %v464 = vpop.f32.mrb[0].mxu0
        %v465 = vadd.f32 %v384, %v464
        %v466 = vpop.f32.mrb[0].mxu0
        %467 = vdwg.mxu0
        %468 = vmatprep.subr.mxu0 0.0
        %v469 = vand.u32 %v376, 4294901760
        %v470 = vsub.f32 %v376, %v469
        %v471 = vand.u32 %v470, 4294901760
        %v472 = vsub.f32 %v470, %v471
        %v473 = vand.u32 %v472, 4294901760
        %474 = vmatpush1.msra.mxu0 %v473
        %475 = vmatprep.subr.mxu0 0.0
        %v476 = vand.u32 %v377, 4294901760
        %v477 = vsub.f32 %v377, %v476
        %v478 = vand.u32 %v477, 4294901760
        %v479 = vsub.f32 %v477, %v478
        %v480 = vand.u32 %v479, 4294901760
        %481 = vmatpush1.msra.mxu0 %v480
        %482 = vmatprep.subr.mxu0 0.0
        %v483 = vand.u32 %v378, 4294901760
        %v484 = vsub.f32 %v378, %v483
        %v485 = vand.u32 %v484, 4294901760
        %v486 = vsub.f32 %v484, %v485
        %v487 = vand.u32 %v486, 4294901760
        %488 = vmatpush1.msra.mxu0 %v487
        %489 = vmatprep.subr.mxu0 0.0
        %490 = vmatpush1.msra.mxu0 0.0
        %491 = vmatprep.subr.mxu0 0.0
        %492 = vmatpush1.msra.mxu0 0.0
        %493 = vmatprep.subr.mxu0 0.0
        %494 = vmatpush1.msra.mxu0 0.0
        %495 = vmatprep.subr.mxu0 0.0
        %496 = vmatpush1.msra.mxu0 0.0
        %497 = vmatprep.subr.mxu0 0.0
        %498 = vmatpush1.msra.mxu0 0.0
        %499 = vmatprep.subr.mxu0 0.0
        %500 = vmatpush1.msra.mxu0 0.0
        %501 = vmatprep.subr.mxu0 0.0
        %502 = vmatpush1.msra.mxu0 0.0
        %503 = vmatprep.subr.mxu0 0.0
        %504 = vmatpush1.msra.mxu0 0.0
        %505 = vmatprep.subr.mxu0 0.0
        %506 = vmatpush1.msra.mxu0 0.0
        %507 = vmatprep.subr.mxu0 0.0
        %508 = vmatpush1.msra.mxu0 0.0
        %509 = vmatprep.subr.mxu0 0.0
        %510 = vmatpush1.msra.mxu0 0.0
        %511 = vmatprep.subr.mxu0 0.0
        %512 = vmatpush1.msra.mxu0 0.0
        %513 = vmatprep.subr.mxu0 0.0
        %514 = vmatpush1.msra.mxu0 0.0
        %515 = vmatprep.subr.mxu0 0.0
        %516 = vmatpush1.msra.mxu0 0.0
        %517 = vmatprep.subr.mxu0 0.0
        %518 = vmatpush1.msra.mxu0 0.0
        %519 = vmatprep.subr.mxu0 0.0
        %520 = vmatpush1.msra.mxu0 0.0
        %521 = vmatprep.subr.mxu0 0.0
        %522 = vmatpush1.msra.mxu0 0.0
        %523 = vmatprep.subr.mxu0 0.0
        %524 = vmatpush1.msra.mxu0 0.0
        %525 = vmatprep.subr.mxu0 0.0
        %526 = vmatpush1.msra.mxu0 0.0
        %527 = vmatprep.subr.mxu0 0.0
        %528 = vmatpush1.msra.mxu0 0.0
        %529 = vmatprep.subr.mxu0 0.0
        %530 = vmatpush1.msra.mxu0 0.0
        %531 = vmatprep.subr.mxu0 0.0
        %532 = vmatpush1.msra.mxu0 0.0
        %533 = vmatprep.subr.mxu0 0.0
        %534 = vmatpush1.msra.mxu0 0.0
        %535 = vmatprep.subr.mxu0 0.0
        %536 = vmatpush1.msra.mxu0 0.0
        %537 = vmatprep.subr.mxu0 0.0
        %538 = vmatpush1.msra.mxu0 0.0
        %539 = vmatprep.subr.mxu0 0.0
        %540 = vmatpush1.msra.mxu0 0.0
        %541 = vmatprep.subr.mxu0 0.0
        %542 = vmatpush1.msra.mxu0 0.0
        %543 = vmatprep.subr.mxu0 0.0
        %544 = vmatpush1.msra.mxu0 0.0
        %545 = vmatprep.subr.mxu0 0.0
        %546 = vmatpush1.msra.mxu0 0.0
        %547 = vmatprep.mubr.f32.mxu0 0.0
        %v548 = vand.u32 %v388, 4294901760
        %549 = vmatmul.mubr.f32.gmra.mrb[0].mxu0 %v548
        %v550 = vpop.f32.mrb[0].mxu0
        %v551 = vadd.f32 %v465, %v550
        %v552 = vpop.f32.mrb[0].mxu0
        %553 = vdwg.mxu0
        %554 = vmatprep.subr.mxu0 0.0
        %v555 = vand.u32 %v376, 4294901760
        %v556 = vsub.f32 %v376, %v555
        %557 = vmatpush1.msra.mxu0 %v556
        %558 = vmatprep.subr.mxu0 0.0
        %v559 = vand.u32 %v377, 4294901760
        %v560 = vsub.f32 %v377, %v559
        %561 = vmatpush1.msra.mxu0 %v560
        %562 = vmatprep.subr.mxu0 0.0
        %v563 = vand.u32 %v378, 4294901760
        %v564 = vsub.f32 %v378, %v563
        %565 = vmatpush1.msra.mxu0 %v564
        %566 = vmatprep.subr.mxu0 0.0
        %567 = vmatpush1.msra.mxu0 0.0
        %568 = vmatprep.subr.mxu0 0.0
        %569 = vmatpush1.msra.mxu0 0.0
        %570 = vmatprep.subr.mxu0 0.0
        %571 = vmatpush1.msra.mxu0 0.0
        %572 = vmatprep.subr.mxu0 0.0
        %573 = vmatpush1.msra.mxu0 0.0
        %574 = vmatprep.subr.mxu0 0.0
        %575 = vmatpush1.msra.mxu0 0.0
        %576 = vmatprep.subr.mxu0 0.0
        %577 = vmatpush1.msra.mxu0 0.0
        %578 = vmatprep.subr.mxu0 0.0
        %579 = vmatpush1.msra.mxu0 0.0
        %580 = vmatprep.subr.mxu0 0.0
        %581 = vmatpush1.msra.mxu0 0.0
        %582 = vmatprep.subr.mxu0 0.0
        %583 = vmatpush1.msra.mxu0 0.0
        %584 = vmatprep.subr.mxu0 0.0
        %585 = vmatpush1.msra.mxu0 0.0
        %586 = vmatprep.subr.mxu0 0.0
        %587 = vmatpush1.msra.mxu0 0.0
        %588 = vmatprep.subr.mxu0 0.0
        %589 = vmatpush1.msra.mxu0 0.0
        %590 = vmatprep.subr.mxu0 0.0
        %591 = vmatpush1.msra.mxu0 0.0
        %592 = vmatprep.subr.mxu0 0.0
        %593 = vmatpush1.msra.mxu0 0.0
        %594 = vmatprep.subr.mxu0 0.0
        %595 = vmatpush1.msra.mxu0 0.0
        %596 = vmatprep.subr.mxu0 0.0
        %597 = vmatpush1.msra.mxu0 0.0
        %598 = vmatprep.subr.mxu0 0.0
        %599 = vmatpush1.msra.mxu0 0.0
        %600 = vmatprep.subr.mxu0 0.0
        %601 = vmatpush1.msra.mxu0 0.0
        %602 = vmatprep.subr.mxu0 0.0
        %603 = vmatpush1.msra.mxu0 0.0
        %604 = vmatprep.subr.mxu0 0.0
        %605 = vmatpush1.msra.mxu0 0.0
        %606 = vmatprep.subr.mxu0 0.0
        %607 = vmatpush1.msra.mxu0 0.0
        %608 = vmatprep.subr.mxu0 0.0
        %609 = vmatpush1.msra.mxu0 0.0
        %610 = vmatprep.subr.mxu0 0.0
        %611 = vmatpush1.msra.mxu0 0.0
        %612 = vmatprep.subr.mxu0 0.0
        %613 = vmatpush1.msra.mxu0 0.0
        %614 = vmatprep.subr.mxu0 0.0
        %615 = vmatpush1.msra.mxu0 0.0
        %616 = vmatprep.subr.mxu0 0.0
        %617 = vmatpush1.msra.mxu0 0.0
        %618 = vmatprep.subr.mxu0 0.0
        %619 = vmatpush1.msra.mxu0 0.0
        %620 = vmatprep.subr.mxu0 0.0
        %621 = vmatpush1.msra.mxu0 0.0
        %622 = vmatprep.subr.mxu0 0.0
        %623 = vmatpush1.msra.mxu0 0.0
        %624 = vmatprep.mubr.f32.mxu0 0.0
        %v625 = vand.u32 %v388, 4294901760
        %v626 = vsub.f32 %v388, %v625
        %627 = vmatmul.mubr.f32.gmra.mrb[0].mxu0 %v626
        %v628 = vpop.f32.mrb[0].mxu0
        %v629 = vadd.f32 %v551, %v628
        %v630 = vpop.f32.mrb[0].mxu0
        %631 = vdwg.mxu0
        %632 = vmatprep.subr.mxu0 0.0
        %v633 = vand.u32 %v376, 4294901760
        %634 = vmatpush1.msra.mxu0 %v633
        %635 = vmatprep.subr.mxu0 0.0
        %v636 = vand.u32 %v377, 4294901760
        %637 = vmatpush1.msra.mxu0 %v636
        %638 = vmatprep.subr.mxu0 0.0
        %v639 = vand.u32 %v378, 4294901760
        %640 = vmatpush1.msra.mxu0 %v639
        %641 = vmatprep.subr.mxu0 0.0
        %642 = vmatpush1.msra.mxu0 0.0
        %643 = vmatprep.subr.mxu0 0.0
        %644 = vmatpush1.msra.mxu0 0.0
        %645 = vmatprep.subr.mxu0 0.0
        %646 = vmatpush1.msra.mxu0 0.0
        %647 = vmatprep.subr.mxu0 0.0
        %648 = vmatpush1.msra.mxu0 0.0
        %649 = vmatprep.subr.mxu0 0.0
        %650 = vmatpush1.msra.mxu0 0.0
        %651 = vmatprep.subr.mxu0 0.0
        %652 = vmatpush1.msra.mxu0 0.0
        %653 = vmatprep.subr.mxu0 0.0
        %654 = vmatpush1.msra.mxu0 0.0
        %655 = vmatprep.subr.mxu0 0.0
        %656 = vmatpush1.msra.mxu0 0.0
        %657 = vmatprep.subr.mxu0 0.0
        %658 = vmatpush1.msra.mxu0 0.0
        %659 = vmatprep.subr.mxu0 0.0
        %660 = vmatpush1.msra.mxu0 0.0
        %661 = vmatprep.subr.mxu0 0.0
        %662 = vmatpush1.msra.mxu0 0.0
        %663 = vmatprep.subr.mxu0 0.0
        %664 = vmatpush1.msra.mxu0 0.0
        %665 = vmatprep.subr.mxu0 0.0
        %666 = vmatpush1.msra.mxu0 0.0
        %667 = vmatprep.subr.mxu0 0.0
        %668 = vmatpush1.msra.mxu0 0.0
        %669 = vmatprep.subr.mxu0 0.0
        %670 = vmatpush1.msra.mxu0 0.0
        %671 = vmatprep.subr.mxu0 0.0
        %672 = vmatpush1.msra.mxu0 0.0
        %673 = vmatprep.subr.mxu0 0.0
        %674 = vmatpush1.msra.mxu0 0.0
        %675 = vmatprep.subr.mxu0 0.0
        %676 = vmatpush1.msra.mxu0 0.0
        %677 = vmatprep.subr.mxu0 0.0
        %678 = vmatpush1.msra.mxu0 0.0
        %679 = vmatprep.subr.mxu0 0.0
        %680 = vmatpush1.msra.mxu0 0.0
        %681 = vmatprep.subr.mxu0 0.0
        %682 = vmatpush1.msra.mxu0 0.0
        %683 = vmatprep.subr.mxu0 0.0
        %684 = vmatpush1.msra.mxu0 0.0
        %685 = vmatprep.subr.mxu0 0.0
        %686 = vmatpush1.msra.mxu0 0.0
        %687 = vmatprep.subr.mxu0 0.0
        %688 = vmatpush1.msra.mxu0 0.0
        %689 = vmatprep.subr.mxu0 0.0
        %690 = vmatpush1.msra.mxu0 0.0
        %691 = vmatprep.subr.mxu0 0.0
        %692 = vmatpush1.msra.mxu0 0.0
        %693 = vmatprep.subr.mxu0 0.0
        %694 = vmatpush1.msra.mxu0 0.0
        %695 = vmatprep.subr.mxu0 0.0
        %696 = vmatpush1.msra.mxu0 0.0
        %697 = vmatprep.subr.mxu0 0.0
        %698 = vmatpush1.msra.mxu0 0.0
        %699 = vmatprep.mubr.f32.mxu0 0.0
        %v700 = vand.u32 %v388, 4294901760
        %v701 = vsub.f32 %v388, %v700
        %v702 = vand.u32 %v701, 4294901760
        %703 = vmatmul.mubr.f32.gmra.mrb[0].mxu0 %v702
        %v704 = vpop.f32.mrb[0].mxu0
        %v705 = vadd.f32 %v629, %v704
        %v706 = vpop.f32.mrb[0].mxu0
        %707 = vdwg.mxu0
        %708 = vmatprep.subr.mxu0 0.0
        %v709 = vand.u32 %v376, 4294901760
        %v710 = vsub.f32 %v376, %v709
        %v711 = vand.u32 %v710, 4294901760
        %712 = vmatpush1.msra.mxu0 %v711
        %713 = vmatprep.subr.mxu0 0.0
        %v714 = vand.u32 %v377, 4294901760
        %v715 = vsub.f32 %v377, %v714
        %v716 = vand.u32 %v715, 4294901760
        %717 = vmatpush1.msra.mxu0 %v716
        %718 = vmatprep.subr.mxu0 0.0
        %v719 = vand.u32 %v378, 4294901760
        %v720 = vsub.f32 %v378, %v719
        %v721 = vand.u32 %v720, 4294901760
        %722 = vmatpush1.msra.mxu0 %v721
        %723 = vmatprep.subr.mxu0 0.0
        %724 = vmatpush1.msra.mxu0 0.0
        %725 = vmatprep.subr.mxu0 0.0
        %726 = vmatpush1.msra.mxu0 0.0
        %727 = vmatprep.subr.mxu0 0.0
        %728 = vmatpush1.msra.mxu0 0.0
        %729 = vmatprep.subr.mxu0 0.0
        %730 = vmatpush1.msra.mxu0 0.0
        %731 = vmatprep.subr.mxu0 0.0
        %732 = vmatpush1.msra.mxu0 0.0
        %733 = vmatprep.subr.mxu0 0.0
        %734 = vmatpush1.msra.mxu0 0.0
        %735 = vmatprep.subr.mxu0 0.0
        %736 = vmatpush1.msra.mxu0 0.0
        %737 = vmatprep.subr.mxu0 0.0
        %738 = vmatpush1.msra.mxu0 0.0
        %739 = vmatprep.subr.mxu0 0.0
        %740 = vmatpush1.msra.mxu0 0.0
        %741 = vmatprep.subr.mxu0 0.0
        %742 = vmatpush1.msra.mxu0 0.0
        %743 = vmatprep.subr.mxu0 0.0
        %744 = vmatpush1.msra.mxu0 0.0
        %745 = vmatprep.subr.mxu0 0.0
        %746 = vmatpush1.msra.mxu0 0.0
        %747 = vmatprep.subr.mxu0 0.0
        %748 = vmatpush1.msra.mxu0 0.0
        %749 = vmatprep.subr.mxu0 0.0
        %750 = vmatpush1.msra.mxu0 0.0
        %751 = vmatprep.subr.mxu0 0.0
        %752 = vmatpush1.msra.mxu0 0.0
        %753 = vmatprep.subr.mxu0 0.0
        %754 = vmatpush1.msra.mxu0 0.0
        %755 = vmatprep.subr.mxu0 0.0
        %756 = vmatpush1.msra.mxu0 0.0
        %757 = vmatprep.subr.mxu0 0.0
        %758 = vmatpush1.msra.mxu0 0.0
        %759 = vmatprep.subr.mxu0 0.0
        %760 = vmatpush1.msra.mxu0 0.0
        %761 = vmatprep.subr.mxu0 0.0
        %762 = vmatpush1.msra.mxu0 0.0
        %763 = vmatprep.subr.mxu0 0.0
        %764 = vmatpush1.msra.mxu0 0.0
        %765 = vmatprep.subr.mxu0 0.0
        %766 = vmatpush1.msra.mxu0 0.0
        %767 = vmatprep.subr.mxu0 0.0
        %768 = vmatpush1.msra.mxu0 0.0
        %769 = vmatprep.subr.mxu0 0.0
        %770 = vmatpush1.msra.mxu0 0.0
        %771 = vmatprep.subr.mxu0 0.0
        %772 = vmatpush1.msra.mxu0 0.0
        %773 = vmatprep.subr.mxu0 0.0
        %774 = vmatpush1.msra.mxu0 0.0
        %775 = vmatprep.subr.mxu0 0.0
        %776 = vmatpush1.msra.mxu0 0.0
        %777 = vmatprep.subr.mxu0 0.0
        %778 = vmatpush1.msra.mxu0 0.0
        %779 = vmatprep.subr.mxu0 0.0
        %780 = vmatpush1.msra.mxu0 0.0
        %781 = vmatprep.mubr.f32.mxu0 0.0
        %v782 = vand.u32 %v388, 4294901760
        %783 = vmatmul.mubr.f32.gmra.mrb[0].mxu0 %v782
        %v784 = vpop.f32.mrb[0].mxu0
        %v785 = vadd.f32 %v705, %v784
        %v786 = vpop.f32.mrb[0].mxu0
        %787 = vdwg.mxu0
        %788 = vmatprep.subr.mxu0 0.0
        %v789 = vand.u32 %v376, 4294901760
        %790 = vmatpush1.msra.mxu0 %v789
        %791 = vmatprep.subr.mxu0 0.0
        %v792 = vand.u32 %v377, 4294901760
        %793 = vmatpush1.msra.mxu0 %v792
        %794 = vmatprep.subr.mxu0 0.0
        %v795 = vand.u32 %v378, 4294901760
        %796 = vmatpush1.msra.mxu0 %v795
        %797 = vmatprep.subr.mxu0 0.0
        %798 = vmatpush1.msra.mxu0 0.0
        %799 = vmatprep.subr.mxu0 0.0
        %800 = vmatpush1.msra.mxu0 0.0
        %801 = vmatprep.subr.mxu0 0.0
        %802 = vmatpush1.msra.mxu0 0.0
        %803 = vmatprep.subr.mxu0 0.0
        %804 = vmatpush1.msra.mxu0 0.0
        %805 = vmatprep.subr.mxu0 0.0
        %806 = vmatpush1.msra.mxu0 0.0
        %807 = vmatprep.subr.mxu0 0.0
        %808 = vmatpush1.msra.mxu0 0.0
        %809 = vmatprep.subr.mxu0 0.0
        %810 = vmatpush1.msra.mxu0 0.0
        %811 = vmatprep.subr.mxu0 0.0
        %812 = vmatpush1.msra.mxu0 0.0
        %813 = vmatprep.subr.mxu0 0.0
        %814 = vmatpush1.msra.mxu0 0.0
        %815 = vmatprep.subr.mxu0 0.0
        %816 = vmatpush1.msra.mxu0 0.0
        %817 = vmatprep.subr.mxu0 0.0
        %818 = vmatpush1.msra.mxu0 0.0
        %819 = vmatprep.subr.mxu0 0.0
        %820 = vmatpush1.msra.mxu0 0.0
        %821 = vmatprep.subr.mxu0 0.0
        %822 = vmatpush1.msra.mxu0 0.0
        %823 = vmatprep.subr.mxu0 0.0
        %824 = vmatpush1.msra.mxu0 0.0
        %825 = vmatprep.subr.mxu0 0.0
        %826 = vmatpush1.msra.mxu0 0.0
        %827 = vmatprep.subr.mxu0 0.0
        %828 = vmatpush1.msra.mxu0 0.0
        %829 = vmatprep.subr.mxu0 0.0
        %830 = vmatpush1.msra.mxu0 0.0
        %831 = vmatprep.subr.mxu0 0.0
        %832 = vmatpush1.msra.mxu0 0.0
        %833 = vmatprep.subr.mxu0 0.0
        %834 = vmatpush1.msra.mxu0 0.0
        %835 = vmatprep.subr.mxu0 0.0
        %836 = vmatpush1.msra.mxu0 0.0
        %837 = vmatprep.subr.mxu0 0.0
        %838 = vmatpush1.msra.mxu0 0.0
        %839 = vmatprep.subr.mxu0 0.0
        %840 = vmatpush1.msra.mxu0 0.0
        %841 = vmatprep.subr.mxu0 0.0
        %842 = vmatpush1.msra.mxu0 0.0
        %843 = vmatprep.subr.mxu0 0.0
        %844 = vmatpush1.msra.mxu0 0.0
        %845 = vmatprep.subr.mxu0 0.0
        %846 = vmatpush1.msra.mxu0 0.0
        %847 = vmatprep.subr.mxu0 0.0
        %848 = vmatpush1.msra.mxu0 0.0
        %849 = vmatprep.subr.mxu0 0.0
        %850 = vmatpush1.msra.mxu0 0.0
        %851 = vmatprep.subr.mxu0 0.0
        %852 = vmatpush1.msra.mxu0 0.0
        %853 = vmatprep.subr.mxu0 0.0
        %854 = vmatpush1.msra.mxu0 0.0
        %855 = vmatprep.mubr.f32.mxu0 0.0
        %v856 = vand.u32 %v388, 4294901760
        %857 = vmatmul.mubr.f32.gmra.mrb[0].mxu0 %v856
        %v858 = vpop.f32.mrb[0].mxu0
        %v859 = vadd.f32 %v785, %v858
        %v860 = vpop.f32.mrb[0].mxu0
        %861 = vdwg.mxu0
        %vm862 = vcmask 486400
        %v863 = vsel %vm862, %v859, 0.0
        %v864 = vrot.slane %v863, 4
        %v865 = vadd.f32 %v863, %v864
        %v866 = vrot.slane %v865, 2
        %v867 = vadd.f32 %v865, %v866
        %v868 = vrot.slane %v867, 1
        %v869 = vadd.f32 %v867, %v868
        %v870 = vmul.f32 %v859, %v859
        %v871 = vsel %vm862, %v870, 0.0
        %v872 = vrot.slane %v871, 4
        %v873 = vadd.f32 %v871, %v872
        %v874 = vrot.slane %v873, 2
        %v875 = vadd.f32 %v873, %v874
        %v876 = vrot.slane %v875, 1
        %v877 = vadd.f32 %v875, %v876
        %v878 = vld [vmem:[%s6] sm:$0xff]
        %v879 = vld [vmem:[%s6 + $0x8] sm:$0xff]
        %v880 = vld [vmem:[%s6 + $0x10] sm:$0xff]
        %v881 = vld [vmem:[%s6 + $0x18] sm:$0xff]
        %v882 = vld [vmem:[%s6 + $0x20] sm:$0xff]
        %v883 = vld [vmem:[%s6 + $0x28] sm:$0xff]
        %v884 = vld [vmem:[%s6 + $0x30] sm:$0xff]
        %v885 = vld [vmem:[%s6 + $0x38] sm:$0xf]
        %vm886 = vcmask 490496
        %v888 = vsel %vm886, %v869, 0
        %vm890 = vcmask 1043456
        %v892 = vsel %vm890, %v885, 0
        %894 = vmatprep.subr.mxu0 0.0
        %895 = vmatpush1.msra.mxu0 %v878
        %896 = vmatprep.subr.mxu0 0.0
        %897 = vmatpush1.msra.mxu0 %v879
        %898 = vmatprep.subr.mxu0 0.0
        %899 = vmatpush1.msra.mxu0 %v880
        %900 = vmatprep.subr.mxu0 0.0
        %901 = vmatpush1.msra.mxu0 %v881
        %902 = vmatprep.subr.mxu0 0.0
        %903 = vmatpush1.msra.mxu0 %v882
        %904 = vmatprep.subr.mxu0 0.0
        %905 = vmatpush1.msra.mxu0 %v883
        %906 = vmatprep.subr.mxu0 0.0
        %907 = vmatpush1.msra.mxu0 %v884
        %908 = vmatprep.subr.mxu0 0.0
        %909 = vmatpush1.msra.mxu0 %v892
        %910 = vmatprep.subr.mxu0 0.0
        %911 = vmatpush1.msra.mxu0 0.0
        %912 = vmatprep.subr.mxu0 0.0
        %913 = vmatpush1.msra.mxu0 0.0
        %914 = vmatprep.subr.mxu0 0.0
        %915 = vmatpush1.msra.mxu0 0.0
        %916 = vmatprep.subr.mxu0 0.0
        %917 = vmatpush1.msra.mxu0 0.0
        %918 = vmatprep.subr.mxu0 0.0
        %919 = vmatpush1.msra.mxu0 0.0
        %920 = vmatprep.subr.mxu0 0.0
        %921 = vmatpush1.msra.mxu0 0.0
        %922 = vmatprep.subr.mxu0 0.0
        %923 = vmatpush1.msra.mxu0 0.0
        %924 = vmatprep.subr.mxu0 0.0
        %925 = vmatpush1.msra.mxu0 0.0
        %926 = vmatprep.subr.mxu0 0.0
        %927 = vmatpush1.msra.mxu0 0.0
        %928 = vmatprep.subr.mxu0 0.0
        %929 = vmatpush1.msra.mxu0 0.0
        %930 = vmatprep.subr.mxu0 0.0
        %931 = vmatpush1.msra.mxu0 0.0
        %932 = vmatprep.subr.mxu0 0.0
        %933 = vmatpush1.msra.mxu0 0.0
        %934 = vmatprep.subr.mxu0 0.0
        %935 = vmatpush1.msra.mxu0 0.0
        %936 = vmatprep.subr.mxu0 0.0
        %937 = vmatpush1.msra.mxu0 0.0
        %938 = vmatprep.subr.mxu0 0.0
        %939 = vmatpush1.msra.mxu0 0.0
        %940 = vmatprep.subr.mxu0 0.0
        %941 = vmatpush1.msra.mxu0 0.0
        %942 = vmatprep.subr.mxu0 0.0
        %943 = vmatpush1.msra.mxu0 0.0
        %944 = vmatprep.subr.mxu0 0.0
        %945 = vmatpush1.msra.mxu0 0.0
        %946 = vmatprep.subr.mxu0 0.0
        %947 = vmatpush1.msra.mxu0 0.0
        %948 = vmatprep.subr.mxu0 0.0
        %949 = vmatpush1.msra.mxu0 0.0
        %950 = vmatprep.subr.mxu0 0.0
        %951 = vmatpush1.msra.mxu0 0.0
        %952 = vmatprep.subr.mxu0 0.0
        %953 = vmatpush1.msra.mxu0 0.0
        %954 = vmatprep.subr.mxu0 0.0
        %955 = vmatpush1.msra.mxu0 0.0
        %956 = vmatprep.subr.mxu0 0.0
        %957 = vmatpush1.msra.mxu0 0.0
        %958 = vmatprep.mubr.f32.mxu0 0.0
        %959 = vmatmul.mubr.f32.gmra.mrb[0].mxu0 %v888
        %v960 = vpop.f32.mrb[0].mxu0
        %v961 = vadd.f32 0.0, %v960
        %v962 = vpop.f32.mrb[0].mxu0
        %963 = vdwg.mxu0
        %v965 = vsel %vm886, %v877, 0
        %967 = vmatprep.subr.mxu0 0.0
        %968 = vmatpush1.msra.mxu0 %v878
        %969 = vmatprep.subr.mxu0 0.0
        %970 = vmatpush1.msra.mxu0 %v879
        %971 = vmatprep.subr.mxu0 0.0
        %972 = vmatpush1.msra.mxu0 %v880
        %973 = vmatprep.subr.mxu0 0.0
        %974 = vmatpush1.msra.mxu0 %v881
        %975 = vmatprep.subr.mxu0 0.0
        %976 = vmatpush1.msra.mxu0 %v882
        %977 = vmatprep.subr.mxu0 0.0
        %978 = vmatpush1.msra.mxu0 %v883
        %979 = vmatprep.subr.mxu0 0.0
        %980 = vmatpush1.msra.mxu0 %v884
        %981 = vmatprep.subr.mxu0 0.0
        %982 = vmatpush1.msra.mxu0 %v892
        %983 = vmatprep.subr.mxu0 0.0
        %984 = vmatpush1.msra.mxu0 0.0
        %985 = vmatprep.subr.mxu0 0.0
        %986 = vmatpush1.msra.mxu0 0.0
        %987 = vmatprep.subr.mxu0 0.0
        %988 = vmatpush1.msra.mxu0 0.0
        %989 = vmatprep.subr.mxu0 0.0
        %990 = vmatpush1.msra.mxu0 0.0
        %991 = vmatprep.subr.mxu0 0.0
        %992 = vmatpush1.msra.mxu0 0.0
        %993 = vmatprep.subr.mxu0 0.0
        %994 = vmatpush1.msra.mxu0 0.0
        %995 = vmatprep.subr.mxu0 0.0
        %996 = vmatpush1.msra.mxu0 0.0
        %997 = vmatprep.subr.mxu0 0.0
        %998 = vmatpush1.msra.mxu0 0.0
        %999 = vmatprep.subr.mxu0 0.0
        %1000 = vmatpush1.msra.mxu0 0.0
        %1001 = vmatprep.subr.mxu0 0.0
        %1002 = vmatpush1.msra.mxu0 0.0
        %1003 = vmatprep.subr.mxu0 0.0
        %1004 = vmatpush1.msra.mxu0 0.0
        %1005 = vmatprep.subr.mxu0 0.0
        %1006 = vmatpush1.msra.mxu0 0.0
        %1007 = vmatprep.subr.mxu0 0.0
        %1008 = vmatpush1.msra.mxu0 0.0
        %1009 = vmatprep.subr.mxu0 0.0
        %1010 = vmatpush1.msra.mxu0 0.0
        %1011 = vmatprep.subr.mxu0 0.0
        %1012 = vmatpush1.msra.mxu0 0.0
        %1013 = vmatprep.subr.mxu0 0.0
        %1014 = vmatpush1.msra.mxu0 0.0
        %1015 = vmatprep.subr.mxu0 0.0
        %1016 = vmatpush1.msra.mxu0 0.0
        %1017 = vmatprep.subr.mxu0 0.0
        %1018 = vmatpush1.msra.mxu0 0.0
        %1019 = vmatprep.subr.mxu0 0.0
        %1020 = vmatpush1.msra.mxu0 0.0
        %1021 = vmatprep.subr.mxu0 0.0
        %1022 = vmatpush1.msra.mxu0 0.0
        %1023 = vmatprep.subr.mxu0 0.0
        %1024 = vmatpush1.msra.mxu0 0.0
        %1025 = vmatprep.subr.mxu0 0.0
        %1026 = vmatpush1.msra.mxu0 0.0
        %1027 = vmatprep.subr.mxu0 0.0
        %1028 = vmatpush1.msra.mxu0 0.0
        %1029 = vmatprep.subr.mxu0 0.0
        %1030 = vmatpush1.msra.mxu0 0.0
        %1031 = vmatprep.mubr.f32.mxu0 0.0
        %1032 = vmatmul.mubr.f32.gmra.mrb[0].mxu0 %v965
        %v1033 = vpop.f32.mrb[0].mxu0
        %v1034 = vadd.f32 0.0, %v1033
        %v1035 = vpop.f32.mrb[0].mxu0
        %1036 = vdwg.mxu0
        %v1037 = vld [vmem:[%s8] sm:$0xf]
        %v1038 = vld [vmem:[#allocation2] sm:$0x1]
        %1040 = vset.pattern.permute.xlu0 0
        %1041 = vperm.xlu0 %1040, %v1038
        %v1042 = vpop.permute.xlu0 %1041
        %v1044 = vlaneseq
        %v1045 = vshrl.u32 %v1044, 7
        %v1046 = vsub.s32 0, %v1045
        %v1047 = vrot.slane %v1042, %v1046
        %vm1048 = vcmask 31744
        %v1050 = vsel %vm1048, %v961, 0
        %v1053 = vsel %vm890, %v1037, 0
        %1055 = vmatprep.subr.mxu0 0.0
        %1056 = vmatpush1.msra.mxu0 %v1053
        %1057 = vmatprep.subr.mxu0 0.0
        %1058 = vmatpush1.msra.mxu0 0.0
        %1059 = vmatprep.subr.mxu0 0.0
        %1060 = vmatpush1.msra.mxu0 0.0
        %1061 = vmatprep.subr.mxu0 0.0
        %1062 = vmatpush1.msra.mxu0 0.0
        %1063 = vmatprep.subr.mxu0 0.0
        %1064 = vmatpush1.msra.mxu0 0.0
        %1065 = vmatprep.subr.mxu0 0.0
        %1066 = vmatpush1.msra.mxu0 0.0
        %1067 = vmatprep.subr.mxu0 0.0
        %1068 = vmatpush1.msra.mxu0 0.0
        %1069 = vmatprep.subr.mxu0 0.0
        %1070 = vmatpush1.msra.mxu0 0.0
        %1071 = vmatprep.subr.mxu0 0.0
        %1072 = vmatpush1.msra.mxu0 0.0
        %1073 = vmatprep.subr.mxu0 0.0
        %1074 = vmatpush1.msra.mxu0 0.0
        %1075 = vmatprep.subr.mxu0 0.0
        %1076 = vmatpush1.msra.mxu0 0.0
        %1077 = vmatprep.subr.mxu0 0.0
        %1078 = vmatpush1.msra.mxu0 0.0
        %1079 = vmatprep.subr.mxu0 0.0
        %1080 = vmatpush1.msra.mxu0 0.0
        %1081 = vmatprep.subr.mxu0 0.0
        %1082 = vmatpush1.msra.mxu0 0.0
        %1083 = vmatprep.subr.mxu0 0.0
        %1084 = vmatpush1.msra.mxu0 0.0
        %1085 = vmatprep.subr.mxu0 0.0
        %1086 = vmatpush1.msra.mxu0 0.0
        %1087 = vmatprep.subr.mxu0 0.0
        %1088 = vmatpush1.msra.mxu0 0.0
        %1089 = vmatprep.subr.mxu0 0.0
        %1090 = vmatpush1.msra.mxu0 0.0
        %1091 = vmatprep.subr.mxu0 0.0
        %1092 = vmatpush1.msra.mxu0 0.0
        %1093 = vmatprep.subr.mxu0 0.0
        %1094 = vmatpush1.msra.mxu0 0.0
        %1095 = vmatprep.subr.mxu0 0.0
        %1096 = vmatpush1.msra.mxu0 0.0
        %1097 = vmatprep.subr.mxu0 0.0
        %1098 = vmatpush1.msra.mxu0 0.0
        %1099 = vmatprep.subr.mxu0 0.0
        %1100 = vmatpush1.msra.mxu0 0.0
        %1101 = vmatprep.subr.mxu0 0.0
        %1102 = vmatpush1.msra.mxu0 0.0
        %1103 = vmatprep.subr.mxu0 0.0
        %1104 = vmatpush1.msra.mxu0 0.0
        %1105 = vmatprep.subr.mxu0 0.0
        %1106 = vmatpush1.msra.mxu0 0.0
        %1107 = vmatprep.subr.mxu0 0.0
        %1108 = vmatpush1.msra.mxu0 0.0
        %1109 = vmatprep.subr.mxu0 0.0
        %1110 = vmatpush1.msra.mxu0 0.0
        %1111 = vmatprep.subr.mxu0 0.0
        %1112 = vmatpush1.msra.mxu0 0.0
        %1113 = vmatprep.subr.mxu0 0.0
        %1114 = vmatpush1.msra.mxu0 0.0
        %1115 = vmatprep.subr.mxu0 0.0
        %1116 = vmatpush1.msra.mxu0 0.0
        %1117 = vmatprep.subr.mxu0 0.0
        %1118 = vmatpush1.msra.mxu0 0.0
        %1119 = vmatprep.mubr.f32.mxu0 0.0
        %1120 = vmatmul.mubr.f32.gmra.mrb[0].mxu0 %v1050
        %v1121 = vpop.f32.mrb[0].mxu0
        %v1122 = vadd.f32 %v1047, %v1121
        %v1123 = vpop.f32.mrb[0].mxu0
        %1124 = vdwg.mxu0
        %v1125 = vld [vmem:[#allocation3] sm:$0x1]
        %1127 = vset.pattern.permute.xlu0 0
        %1128 = vperm.xlu0 %1127, %v1125
        %v1129 = vpop.permute.xlu0 %1128
        %v1131 = vlaneseq
        %v1132 = vshrl.u32 %v1131, 7
        %v1133 = vsub.s32 0, %v1132
        %v1134 = vrot.slane %v1129, %v1133
        %v1136 = vsel %vm1048, %v1034, 0
        %1138 = vmatprep.subr.mxu0 0.0
        %1139 = vmatpush1.msra.mxu0 %v1053
        %1140 = vmatprep.subr.mxu0 0.0
        %1141 = vmatpush1.msra.mxu0 0.0
        %1142 = vmatprep.subr.mxu0 0.0
        %1143 = vmatpush1.msra.mxu0 0.0
        %1144 = vmatprep.subr.mxu0 0.0
        %1145 = vmatpush1.msra.mxu0 0.0
        %1146 = vmatprep.subr.mxu0 0.0
        %1147 = vmatpush1.msra.mxu0 0.0
        %1148 = vmatprep.subr.mxu0 0.0
        %1149 = vmatpush1.msra.mxu0 0.0
        %1150 = vmatprep.subr.mxu0 0.0
        %1151 = vmatpush1.msra.mxu0 0.0
        %1152 = vmatprep.subr.mxu0 0.0
        %1153 = vmatpush1.msra.mxu0 0.0
        %1154 = vmatprep.subr.mxu0 0.0
        %1155 = vmatpush1.msra.mxu0 0.0
        %1156 = vmatprep.subr.mxu0 0.0
        %1157 = vmatpush1.msra.mxu0 0.0
        %1158 = vmatprep.subr.mxu0 0.0
        %1159 = vmatpush1.msra.mxu0 0.0
        %1160 = vmatprep.subr.mxu0 0.0
        %1161 = vmatpush1.msra.mxu0 0.0
        %1162 = vmatprep.subr.mxu0 0.0
        %1163 = vmatpush1.msra.mxu0 0.0
        %1164 = vmatprep.subr.mxu0 0.0
        %1165 = vmatpush1.msra.mxu0 0.0
        %1166 = vmatprep.subr.mxu0 0.0
        %1167 = vmatpush1.msra.mxu0 0.0
        %1168 = vmatprep.subr.mxu0 0.0
        %1169 = vmatpush1.msra.mxu0 0.0
        %1170 = vmatprep.subr.mxu0 0.0
        %1171 = vmatpush1.msra.mxu0 0.0
        %1172 = vmatprep.subr.mxu0 0.0
        %1173 = vmatpush1.msra.mxu0 0.0
        %1174 = vmatprep.subr.mxu0 0.0
        %1175 = vmatpush1.msra.mxu0 0.0
        %1176 = vmatprep.subr.mxu0 0.0
        %1177 = vmatpush1.msra.mxu0 0.0
        %1178 = vmatprep.subr.mxu0 0.0
        %1179 = vmatpush1.msra.mxu0 0.0
        %1180 = vmatprep.subr.mxu0 0.0
        %1181 = vmatpush1.msra.mxu0 0.0
        %1182 = vmatprep.subr.mxu0 0.0
        %1183 = vmatpush1.msra.mxu0 0.0
        %1184 = vmatprep.subr.mxu0 0.0
        %1185 = vmatpush1.msra.mxu0 0.0
        %1186 = vmatprep.subr.mxu0 0.0
        %1187 = vmatpush1.msra.mxu0 0.0
        %1188 = vmatprep.subr.mxu0 0.0
        %1189 = vmatpush1.msra.mxu0 0.0
        %1190 = vmatprep.subr.mxu0 0.0
        %1191 = vmatpush1.msra.mxu0 0.0
        %1192 = vmatprep.subr.mxu0 0.0
        %1193 = vmatpush1.msra.mxu0 0.0
        %1194 = vmatprep.subr.mxu0 0.0
        %1195 = vmatpush1.msra.mxu0 0.0
        %1196 = vmatprep.subr.mxu0 0.0
        %1197 = vmatpush1.msra.mxu0 0.0
        %1198 = vmatprep.subr.mxu0 0.0
        %1199 = vmatpush1.msra.mxu0 0.0
        %1200 = vmatprep.subr.mxu0 0.0
        %1201 = vmatpush1.msra.mxu0 0.0
        %1202 = vmatprep.mubr.f32.mxu0 0.0
        %1203 = vmatmul.mubr.f32.gmra.mrb[0].mxu0 %v1136
        %v1204 = vpop.f32.mrb[0].mxu0
        %v1205 = vadd.f32 %v1134, %v1204
        %v1206 = vpop.f32.mrb[0].mxu0
        %1207 = vdwg.mxu0
        %vm1208 = vcmask 24576
        %v1209 = vsel %vm1208, %v961, 0.0
        %1210 = vadd.xlane.f32.xlu0 %v1209
        %v1211 = vpop.xlane.xlu0 %1210
        %v1212 = vadd.f32 %v1038, %v1211
        %vm1213 = vcmask 0
        %1214 = vst.msk [vmem:[#allocation2] sm:$0x1] %vm1213, %v1212
        %v1215 = vld [vmem:[#allocation3] sm:$0x1]
        %v1216 = vsel %vm1208, %v1034, 0.0
        %1217 = vadd.xlane.f32.xlu0 %v1216
        %v1218 = vpop.xlane.xlu0 %1217
        %v1219 = vadd.f32 %v1215, %v1218
        %1220 = vst.msk [vmem:[#allocation3] sm:$0x1] %vm1213, %v1219
        %v1221 = vlaneseq
        %v1222 = vand.u32 %v1221, 127
        %s1223 = smul.u32 %s31, 4
        %v1224 = vstv %s1223
        %v1225 = vadd.s32 %v1224, %v1222
        %v1226 = vadd.s32 %v1225, 1
        %v1227 = vcvt.s32.f32 %v1226
        %v1228 = vmul.f32 %v1227, 60.0
        %v1229 = vrcp.pop %v1228
        %v1230 = vmul.f32 %v1122, %v1229
        %v1231 = vmul.f32 %v1230, 2.0
        %v1232 = vmul.f32 %v1231, %v1122
        %v1233 = vsub.f32 %v1205, %v1232
        %v1234 = vmul.f32 %v1233, %v1229
        %v1235 = vmul.f32 %v1230, %v1230
        %v1236 = vadd.f32 %v1234, %v1235
        %v1237 = vadd.f32 %v1236, 1e-05
        %v1238 = vrsqrt.pop %v1237
        %v1239 = vld [vmem:[%s7] sm:$0xf]
        %v1241 = vsel %vm1048, %v1230, 0
        %v1244 = vsel %vm890, %v1239, 0
        %1246 = vmatprep.subr.mxu0 0.0
        %1247 = vmatpush1.msra.mxu0 %v1244
        %1248 = vmatprep.subr.mxu0 0.0
        %1249 = vmatpush1.msra.mxu0 0.0
        %1250 = vmatprep.subr.mxu0 0.0
        %1251 = vmatpush1.msra.mxu0 0.0
        %1252 = vmatprep.subr.mxu0 0.0
        %1253 = vmatpush1.msra.mxu0 0.0
        %1254 = vmatprep.subr.mxu0 0.0
        %1255 = vmatpush1.msra.mxu0 0.0
        %1256 = vmatprep.subr.mxu0 0.0
        %1257 = vmatpush1.msra.mxu0 0.0
        %1258 = vmatprep.subr.mxu0 0.0
        %1259 = vmatpush1.msra.mxu0 0.0
        %1260 = vmatprep.subr.mxu0 0.0
        %1261 = vmatpush1.msra.mxu0 0.0
        %1262 = vmatprep.subr.mxu0 0.0
        %1263 = vmatpush1.msra.mxu0 0.0
        %1264 = vmatprep.subr.mxu0 0.0
        %1265 = vmatpush1.msra.mxu0 0.0
        %1266 = vmatprep.subr.mxu0 0.0
        %1267 = vmatpush1.msra.mxu0 0.0
        %1268 = vmatprep.subr.mxu0 0.0
        %1269 = vmatpush1.msra.mxu0 0.0
        %1270 = vmatprep.subr.mxu0 0.0
        %1271 = vmatpush1.msra.mxu0 0.0
        %1272 = vmatprep.subr.mxu0 0.0
        %1273 = vmatpush1.msra.mxu0 0.0
        %1274 = vmatprep.subr.mxu0 0.0
        %1275 = vmatpush1.msra.mxu0 0.0
        %1276 = vmatprep.subr.mxu0 0.0
        %1277 = vmatpush1.msra.mxu0 0.0
        %1278 = vmatprep.subr.mxu0 0.0
        %1279 = vmatpush1.msra.mxu0 0.0
        %1280 = vmatprep.subr.mxu0 0.0
        %1281 = vmatpush1.msra.mxu0 0.0
        %1282 = vmatprep.subr.mxu0 0.0
        %1283 = vmatpush1.msra.mxu0 0.0
        %1284 = vmatprep.subr.mxu0 0.0
        %1285 = vmatpush1.msra.mxu0 0.0
        %1286 = vmatprep.subr.mxu0 0.0
        %1287 = vmatpush1.msra.mxu0 0.0
        %1288 = vmatprep.subr.mxu0 0.0
        %1289 = vmatpush1.msra.mxu0 0.0
        %1290 = vmatprep.subr.mxu0 0.0
        %1291 = vmatpush1.msra.mxu0 0.0
        %1292 = vmatprep.subr.mxu0 0.0
        %1293 = vmatpush1.msra.mxu0 0.0
        %1294 = vmatprep.subr.mxu0 0.0
        %1295 = vmatpush1.msra.mxu0 0.0
        %1296 = vmatprep.subr.mxu0 0.0
        %1297 = vmatpush1.msra.mxu0 0.0
        %1298 = vmatprep.subr.mxu0 0.0
        %1299 = vmatpush1.msra.mxu0 0.0
        %1300 = vmatprep.subr.mxu0 0.0
        %1301 = vmatpush1.msra.mxu0 0.0
        %1302 = vmatprep.subr.mxu0 0.0
        %1303 = vmatpush1.msra.mxu0 0.0
        %1304 = vmatprep.subr.mxu0 0.0
        %1305 = vmatpush1.msra.mxu0 0.0
        %1306 = vmatprep.subr.mxu0 0.0
        %1307 = vmatpush1.msra.mxu0 0.0
        %1308 = vmatprep.subr.mxu0 0.0
        %1309 = vmatpush1.msra.mxu0 0.0
        %1310 = vmatprep.mubr.f32.mxu0 0.0
        %1311 = vmatmul.mubr.f32.gmra.mrb[0].mxu0 %v1241
        %v1312 = vpop.f32.mrb[0].mxu0
        %v1313 = vadd.f32 0.0, %v1312
        %v1314 = vpop.f32.mrb[0].mxu0
        %1315 = vdwg.mxu0
        %v1317 = vsel %vm1048, %v1238, 0
        %1319 = vmatprep.subr.mxu0 0.0
        %1320 = vmatpush1.msra.mxu0 %v1244
        %1321 = vmatprep.subr.mxu0 0.0
        %1322 = vmatpush1.msra.mxu0 0.0
        %1323 = vmatprep.subr.mxu0 0.0
        %1324 = vmatpush1.msra.mxu0 0.0
        %1325 = vmatprep.subr.mxu0 0.0
        %1326 = vmatpush1.msra.mxu0 0.0
        %1327 = vmatprep.subr.mxu0 0.0
        %1328 = vmatpush1.msra.mxu0 0.0
        %1329 = vmatprep.subr.mxu0 0.0
        %1330 = vmatpush1.msra.mxu0 0.0
        %1331 = vmatprep.subr.mxu0 0.0
        %1332 = vmatpush1.msra.mxu0 0.0
        %1333 = vmatprep.subr.mxu0 0.0
        %1334 = vmatpush1.msra.mxu0 0.0
        %1335 = vmatprep.subr.mxu0 0.0
        %1336 = vmatpush1.msra.mxu0 0.0
        %1337 = vmatprep.subr.mxu0 0.0
        %1338 = vmatpush1.msra.mxu0 0.0
        %1339 = vmatprep.subr.mxu0 0.0
        %1340 = vmatpush1.msra.mxu0 0.0
        %1341 = vmatprep.subr.mxu0 0.0
        %1342 = vmatpush1.msra.mxu0 0.0
        %1343 = vmatprep.subr.mxu0 0.0
        %1344 = vmatpush1.msra.mxu0 0.0
        %1345 = vmatprep.subr.mxu0 0.0
        %1346 = vmatpush1.msra.mxu0 0.0
        %1347 = vmatprep.subr.mxu0 0.0
        %1348 = vmatpush1.msra.mxu0 0.0
        %1349 = vmatprep.subr.mxu0 0.0
        %1350 = vmatpush1.msra.mxu0 0.0
        %1351 = vmatprep.subr.mxu0 0.0
        %1352 = vmatpush1.msra.mxu0 0.0
        %1353 = vmatprep.subr.mxu0 0.0
        %1354 = vmatpush1.msra.mxu0 0.0
        %1355 = vmatprep.subr.mxu0 0.0
        %1356 = vmatpush1.msra.mxu0 0.0
        %1357 = vmatprep.subr.mxu0 0.0
        %1358 = vmatpush1.msra.mxu0 0.0
        %1359 = vmatprep.subr.mxu0 0.0
        %1360 = vmatpush1.msra.mxu0 0.0
        %1361 = vmatprep.subr.mxu0 0.0
        %1362 = vmatpush1.msra.mxu0 0.0
        %1363 = vmatprep.subr.mxu0 0.0
        %1364 = vmatpush1.msra.mxu0 0.0
        %1365 = vmatprep.subr.mxu0 0.0
        %1366 = vmatpush1.msra.mxu0 0.0
        %1367 = vmatprep.subr.mxu0 0.0
        %1368 = vmatpush1.msra.mxu0 0.0
        %1369 = vmatprep.subr.mxu0 0.0
        %1370 = vmatpush1.msra.mxu0 0.0
        %1371 = vmatprep.subr.mxu0 0.0
        %1372 = vmatpush1.msra.mxu0 0.0
        %1373 = vmatprep.subr.mxu0 0.0
        %1374 = vmatpush1.msra.mxu0 0.0
        %1375 = vmatprep.subr.mxu0 0.0
        %1376 = vmatpush1.msra.mxu0 0.0
        %1377 = vmatprep.subr.mxu0 0.0
        %1378 = vmatpush1.msra.mxu0 0.0
        %1379 = vmatprep.subr.mxu0 0.0
        %1380 = vmatpush1.msra.mxu0 0.0
        %1381 = vmatprep.subr.mxu0 0.0
        %1382 = vmatpush1.msra.mxu0 0.0
        %1383 = vmatprep.mubr.f32.mxu0 0.0
        %1384 = vmatmul.mubr.f32.gmra.mrb[0].mxu0 %v1317
        %v1385 = vpop.f32.mrb[0].mxu0
        %v1386 = vadd.f32 0.0, %v1385
        %v1387 = vpop.f32.mrb[0].mxu0
        %1388 = vdwg.mxu0
        %v1389 = vlaneseq
        %v1390 = vshrl.u32 %v1389, 7
        %v1391 = vsub.s32 0, %v1390
        %v1392 = vrot.slane %v1313, %v1391
        %v1393 = vsub.f32 %v859, %v1392
        %v1394 = vlaneseq
        %v1395 = vshrl.u32 %v1394, 7
        %v1396 = vsub.s32 0, %v1395
        %v1397 = vrot.slane %v1386, %v1396
        %v1398 = vmul.f32 %v1393, %v1397
        %v1399 = vld [vmem:[%s3] sm:$0xf]
        %1401 = vset.pattern.permute.xlu0 0
        %1402 = vperm.xlu0 %1401, %v1399
        %v1403 = vpop.permute.xlu0 %1402
        %v1405 = vmul.f32 %v1398, %v1403
        %v1406 = vld [vmem:[%s4] sm:$0xf]
        %1408 = vset.pattern.permute.xlu0 0
        %1409 = vperm.xlu0 %1408, %v1406
        %v1410 = vpop.permute.xlu0 %1409
        %v1412 = vadd.f32 %v1405, %v1410
        %vm1413 = vcmp.ge.f32.partialorder %v1412, 0.0
        %v1414 = vld [vmem:[%s5] sm:$0xf]
        %1416 = vset.pattern.permute.xlu0 0
        %1417 = vperm.xlu0 %1416, %v1414
        %v1418 = vpop.permute.xlu0 %1417
        %v1420 = vmul.f32 %v1418, %v1412
        %v1421 = vsel %vm1413, %v1412, %v1420
        %1422 = vst.msk [vmem:[%s368] sm:$0xf] %vm862, %v1421
        %s1423 = sand.u32 %s244, 1
        %s1424 = scalar_lea.sflag [#allocation6], %s1423
        %s1425 = sand.u32 %s244, 1
        %s1426 = smul.addr %s1425, 4
        %s1427 = scalar_lea.vmem [#allocation7], %s1426
        // Predicated region
        $region65: #{tpu_custom_call.1} parent=55 // pred_check
          %p1428 = pneg %p254
        $region66: #{tpu_custom_call.1} parent=55 // pred_check_branch
          %1430 = sbr.rel (%p1428) target = $region68
        $region67: #{tpu_custom_call.1} parent=55 // pred_region
          %s1432 = ssub.s32 64, 64
          %1433 = vsyncadd %s1424, %s1432
          %s1434 = smul.addr %s30, 2
          %s1435 = sadd.s32 %s31, %s1434
          %s1436 = smul.addr %s1435, 64
          %s1437 = scalar_lea.hbm %s9, %s1436
          %s1439 = sshll.u32 %s1427, 4
          %s1440 = int_to_ptr.vmem [resolvable:$true] %s1439
          %1442 = dma.vmem_to_hbm [thread:$0]  %s1440, 64, %s1437, %s1424
        $region68: #{tpu_custom_call.1} parent=55 // pred_fallthru
          _
      $region56: #{tpu_custom_call.1} parent=5 // pred_fallthru
        _
      %p1443 = scmp.le.s32.totalorder 2, %s21
      // Predicated region
      $region69: #{tpu_custom_call.1} parent=5 // pred_check
        %p1444 = pneg %p1443
      $region70: #{tpu_custom_call.1} parent=5 // pred_check_branch
        %1446 = sbr.rel (%p1444) target = $region72
      $region71: #{tpu_custom_call.1} parent=5 // pred_region
        %s1447 = ssub.s32 %s21, 2
        // Predicated region
        $region73: #{tpu_custom_call.1} parent=71 // pred_check
          %p1448 = pneg %p260
        $region74: #{tpu_custom_call.1} parent=71 // pred_check_branch
          %1450 = sbr.rel (%p1448) target = $region76
        $region75: #{tpu_custom_call.1} parent=71 // pred_region
          %s1451 = sand.u32 %s245, 1
          %s1452 = scalar_lea.sflag [#allocation6], %s1451
          %s1453 = sand.u32 %s245, 1
          %s1454 = smul.addr %s1453, 4
          %s1455 = scalar_lea.vmem [#allocation7], %s1454
          %1456 = dma.done %s1452, 64
        $region76: #{tpu_custom_call.1} parent=71 // pred_fallthru
          _
      $region72: #{tpu_custom_call.1} parent=5 // pred_fallthru
        _
    $region6: #{tpu_custom_call.1} parent=1 // loop_footer
      %s25 = sadd.s32 1, %s21
    $region7: #{tpu_custom_call.1} parent=1 // loop_footer_branch
      %20 = sbr.rel target = $region3
    $region8: #{tpu_custom_call.1} parent=1 // loop_exit
      _
    %1457 = vsyncpa [#allocation5], 1
    %s1458 = scalar_lea.sflag [#allocation5], 1
    %1459 = vsyncpa %s1458, 1
    %1460 = vsyncpa [#allocation6], 1
    %s1461 = scalar_lea.sflag [#allocation6], 1
    %1462 = vsyncpa %s1461, 1

</llo_original>
